<compile_context>
chip_gen: v6e
topology: v6e:2x2x1
jax: 0.10.0
libtpu: 0.0.40
codegen_flags: <defaults>
</compile_context>

<pallas_src>
import jax
import jax.numpy as jnp
from jax.experimental import pallas as pl
from jax.experimental.pallas import tpu as pltpu

OBS_DIM = 32
ACTION_DIM = 8
H1, H2, H3, H4 = 1024, 512, 300, 1
H3_PAD = 384                 # 300 padded up to a lane multiple of 128

MAX_BATCH_TILE = 512         # rows per grid step (multiple of 8/128, fits VMEM)


def _round_up(n, m):
    return ((n + m - 1) // m) * m


def _critic_kernel(x_ref, a_ref,
                   w1_ref, b1_ref,
                   w2x_ref, w2a_ref, b2_ref,
                   w3_ref, b3_ref,
                   w4_ref, b4_ref,
                   out_ref):
    wdt = w1_ref.dtype                      # matmul operand dtype (bf16 or f32)
    x = x_ref[...].astype(wdt)
    a = a_ref[...].astype(wdt)

    # linear1 + relu   (accumulate in f32 on the MXU)
    h1 = jnp.dot(x, w1_ref[...], preferred_element_type=jnp.float32) + b1_ref[...]
    h1 = jnp.maximum(h1, 0.0)

    # concat([h1, a]) @ W2^T  ==  h1 @ W2x^T + a @ W2a^T
    h2 = (jnp.dot(h1.astype(wdt), w2x_ref[...], preferred_element_type=jnp.float32)
          + jnp.dot(a, w2a_ref[...], preferred_element_type=jnp.float32)
          + b2_ref[...])
    h2 = jnp.maximum(h2, 0.0)

    # linear3 + relu  (output dim zero-padded 300 -> 384; pads stay exactly 0)
    h3 = jnp.dot(h2.astype(wdt), w3_ref[...],
                 preferred_element_type=jnp.float32) + b3_ref[...]
    h3 = jnp.maximum(h3, 0.0)

    # linear4 (out_features == 1): VPU multiply + lane reduction instead of an
    # MXU pass with only 1 useful column.  Padded columns multiply by 0.
    out_ref[...] = (jnp.sum(h3 * w4_ref[...], axis=-1, keepdims=True)
                    + b4_ref[...])


def prepare_critic_params(params, weight_dtype=jnp.bfloat16):
    """One-time glue (keep OUT of the hot path): transpose weights to [in, out],
    split W2 at the concat boundary, zero-pad layer 3 to 384 lanes, reshape
    biases to [1, out].  bf16 weights by default; pass jnp.float32 for the
    verification path.  Non-matmul epilogue params stay f32 (v5e VPU/EUP have
    no bf16)."""
    w1, b1, w2, b2, w3, b3, w4, b4 = params
    w1t = jnp.asarray(w1.T, weight_dtype)                       # [obs_dim, 1024]
    w2xt = jnp.asarray(w2[:, :H1].T, weight_dtype)              # [1024, 512]
    w2at = jnp.asarray(w2[:, H1:].T, weight_dtype)              # [action_dim, 512]
    w3t = jnp.zeros((H2, H3_PAD), weight_dtype).at[:, :H3].set(
        jnp.asarray(w3.T, weight_dtype))                        # [512, 384]
    b3r = jnp.zeros((1, H3_PAD), jnp.float32).at[:, :H3].set(
        jnp.asarray(b3.reshape(1, H3), jnp.float32))            # [1, 384]
    w4r = jnp.zeros((1, H3_PAD), jnp.float32).at[:, :H3].set(
        jnp.asarray(w4.reshape(1, H3), jnp.float32))            # [1, 384]
    b1r = jnp.asarray(b1.reshape(1, H1), jnp.float32)
    b2r = jnp.asarray(b2.reshape(1, H2), jnp.float32)
    b4r = jnp.asarray(b4.reshape(1, H4), jnp.float32)
    return (w1t, b1r, w2xt, w2at, b2r, w3t, b3r, w4r, b4r)


@jax.jit
def critic_forward(x, a, prepared_params):
    """x: [B, obs_dim] f32, a: [B, action_dim] f32 -> q: [B, 1] f32.

    `prepared_params` comes from `prepare_critic_params` (pre-transposed,
    bf16 by default)."""
    (w1t, b1r, w2xt, w2at, b2r, w3t, b3r, w4r, b4r) = prepared_params
    B, obs_dim = x.shape
    act_dim = a.shape[1]

    # Batch tiling:
    #  * B <= 8: single full-batch block (latency floor is weight DMA anyway).
    #  * larger B: split into >=2 grid steps (v7x megacore gets both TCs busy),
    #    tile a multiple of 8, capped at 512 rows (amortizes per-step overhead
    #    on v6e while staying comfortably inside v7x's 64 MiB VMEM).
    if B <= 8:
        tb = B
    else:
        tb = min(MAX_BATCH_TILE, _round_up(pl.cdiv(B, 2), 8))
    grid = (pl.cdiv(B, tb),)

    def batch_map(i):
        return (i, 0)

    def const_map(i):
        return (0, 0)

    # Weights/biases: constant index_map -> stays VMEM-resident across steps.
    # (Single-buffering them via pipeline_mode would save ~1.4 MB bf16; left
    # at the default since total VMEM use is already small.)
    weight_specs = [
        pl.BlockSpec(w1t.shape, const_map),
        pl.BlockSpec(b1r.shape, const_map),
        pl.BlockSpec(w2xt.shape, const_map),
        pl.BlockSpec(w2at.shape, const_map),
        pl.BlockSpec(b2r.shape, const_map),
        pl.BlockSpec(w3t.shape, const_map),
        pl.BlockSpec(b3r.shape, const_map),
        pl.BlockSpec(w4r.shape, const_map),
        pl.BlockSpec(b4r.shape, const_map),
    ]

    # Advisory cost estimate so XLA can schedule/overlap around the call.
    flops = 2 * B * (obs_dim * H1 + H1 * H2 + act_dim * H2 + H2 * H3_PAD + H3_PAD)
    param_bytes = sum(int(p.size) * p.dtype.itemsize for p in prepared_params)
    bytes_accessed = (param_bytes
                      + int(x.size) * x.dtype.itemsize
                      + int(a.size) * a.dtype.itemsize
                      + B * H4 * 4)
    cost = pl.CostEstimate(flops=flops, transcendentals=0,
                           bytes_accessed=bytes_accessed)

    return pl.pallas_call(
        _critic_kernel,
        out_shape=jax.ShapeDtypeStruct((B, H4), jnp.float32),
        grid=grid,
        in_specs=[
            pl.BlockSpec((tb, obs_dim), batch_map),   # x tile
            pl.BlockSpec((tb, act_dim), batch_map),   # a tile
            *weight_specs,                            # VMEM-resident weights/biases
        ],
        out_specs=pl.BlockSpec((tb, H4), batch_map),
        compiler_params=pltpu.CompilerParams(
            dimension_semantics=("parallel",),        # megacore sharding on v7x
            vmem_limit_bytes=32 << 20,                # calibrated; fits v7x 64 MiB
        ),
        cost_estimate=cost,
    )(x, a, w1t, b1r, w2xt, w2at, b2r, w3t, b3r, w4r, b4r)


def init_critic_params(key, obs_dim, action_dim):
    """Deterministic init mimicking PyTorch nn.Linear default (U[-1/sqrt(fan_in), +])."""
    def linear(k, fan_in, fan_out):
        kw, kb = jax.random.split(k)
        bound = 1.0 / jnp.sqrt(fan_in)
        w = jax.random.uniform(kw, (fan_out, fan_in), jnp.float32, -bound, bound)
        b = jax.random.uniform(kb, (fan_out,), jnp.float32, -bound, bound)
        return w, b

    k1, k2, k3, k4 = jax.random.split(key, 4)
    w1, b1 = linear(k1, obs_dim, H1)
    w2, b2 = linear(k2, H1 + action_dim, H2)
    w3, b3 = linear(k3, H2, H3)
    w4, b4 = linear(k4, H3, H4)
    return (w1, b1, w2, b2, w3, b3, w4, b4)


def critic_reference(x, a, params):
    (w1, b1, w2, b2, w3, b3, w4, b4) = params
    h1 = jax.nn.relu(x @ w1.T + b1)
    xa = jnp.concatenate([h1, a], axis=1)
    h2 = jax.nn.relu(xa @ w2.T + b2)
    h3 = jax.nn.relu(h2 @ w3.T + b3)
    return h3 @ w4.T + b4


if __name__ == "__main__":
    key = jax.random.PRNGKey(0)
    kp, kx, ka = jax.random.split(key, 3)

    raw_params = init_critic_params(kp, OBS_DIM, ACTION_DIM)

    # Small-batch path (single grid step).
    B = 2
    x = jax.random.normal(kx, (B, OBS_DIM), jnp.float32)
    a = jax.random.normal(ka, (B, ACTION_DIM), jnp.float32)
    q_ref = critic_reference(x, a, raw_params)

    # Default path: bf16 weights, f32 accumulation.
    params_bf16 = prepare_critic_params(raw_params)
    q = critic_forward(x, a, params_bf16)
    jax.block_until_ready(q)
    assert q.shape == (B, 1)
    assert jnp.allclose(q, q_ref, atol=5e-2, rtol=5e-2), (q, q_ref)

    # f32 verification path (tight tolerance).
    params_f32 = prepare_critic_params(raw_params, jnp.float32)
    q32 = critic_forward(x, a, params_f32)
    jax.block_until_ready(q32)
    assert q32.shape == (B, 1)
    assert jnp.allclose(q32, q_ref, atol=1e-4, rtol=1e-4), (q32, q_ref)

    # Multi-step grid with a partial last tile (exercises batch tiling/masking).
    B2 = 100
    x2 = jax.random.normal(kx, (B2, OBS_DIM), jnp.float32)
    a2 = jax.random.normal(ka, (B2, ACTION_DIM), jnp.float32)
    q2 = critic_forward(x2, a2, params_f32)
    jax.block_until_ready(q2)
    q2_ref = critic_reference(x2, a2, raw_params)
    assert q2.shape == (B2, 1)
    assert jnp.allclose(q2, q2_ref, atol=1e-4, rtol=1e-4)

    print("KERNEL_OK")
</pallas_src>

<mosaic_0001>
module attributes {stable_mosaic.version = 11 : i64} {
  func.func @_critic_kernel(%arg0: i32, %arg1: memref<2x32xf32, #tpu.memory_space<vmem>>, %arg2: memref<2x8xf32, #tpu.memory_space<vmem>>, %arg3: memref<32x1024xbf16, #tpu.memory_space<vmem>>, %arg4: memref<1x1024xf32, #tpu.memory_space<vmem>>, %arg5: memref<1024x512xbf16, #tpu.memory_space<vmem>>, %arg6: memref<8x512xbf16, #tpu.memory_space<vmem>>, %arg7: memref<1x512xf32, #tpu.memory_space<vmem>>, %arg8: memref<512x384xbf16, #tpu.memory_space<vmem>>, %arg9: memref<1x384xf32, #tpu.memory_space<vmem>>, %arg10: memref<1x384xf32, #tpu.memory_space<vmem>>, %arg11: memref<1x1xf32, #tpu.memory_space<vmem>>, %arg12: memref<2x1xf32, #tpu.memory_space<vmem>>) attributes {dimension_semantics = [#tpu.dimension_semantics<parallel>], iteration_bounds = array<i64: 1>, scalar_prefetch = 0 : i64, scratch_operands = 0 : i64, tpu.core_type = #tpu.core_type<tc>, window_params = [{transform_indices = @transform_0, window_bounds = array<i64: 2, 32>}, {transform_indices = @transform_1, window_bounds = array<i64: 2, 8>}, {pipeline_mode = #tpu.pipeline_mode<synchronous>, transform_indices = @transform_2, window_bounds = array<i64: 32, 1024>}, {pipeline_mode = #tpu.pipeline_mode<synchronous>, transform_indices = @transform_3, window_bounds = array<i64: 1, 1024>}, {pipeline_mode = #tpu.pipeline_mode<synchronous>, transform_indices = @transform_4, window_bounds = array<i64: 1024, 512>}, {pipeline_mode = #tpu.pipeline_mode<synchronous>, transform_indices = @transform_5, window_bounds = array<i64: 8, 512>}, {pipeline_mode = #tpu.pipeline_mode<synchronous>, transform_indices = @transform_6, window_bounds = array<i64: 1, 512>}, {pipeline_mode = #tpu.pipeline_mode<synchronous>, transform_indices = @transform_7, window_bounds = array<i64: 512, 384>}, {pipeline_mode = #tpu.pipeline_mode<synchronous>, transform_indices = @transform_8, window_bounds = array<i64: 1, 384>}, {pipeline_mode = #tpu.pipeline_mode<synchronous>, transform_indices = @transform_9, window_bounds = array<i64: 1, 384>}, {pipeline_mode = #tpu.pipeline_mode<synchronous>, transform_indices = @transform_10, window_bounds = array<i64: 1, 1>}, {transform_indices = @transform_11, window_bounds = array<i64: 2, 1>}]} {
    %c0 = arith.constant 0 : index
    %c0_0 = arith.constant 0 : index
    %0 = vector.load %arg1[%c0, %c0_0] : memref<2x32xf32, #tpu.memory_space<vmem>>, vector<2x32xf32>
    %1 = arith.truncf %0 : vector<2x32xf32> to vector<2x32xbf16>
    %c0_1 = arith.constant 0 : index
    %c0_2 = arith.constant 0 : index
    %2 = vector.load %arg2[%c0_1, %c0_2] : memref<2x8xf32, #tpu.memory_space<vmem>>, vector<2x8xf32>
    %3 = arith.truncf %2 : vector<2x8xf32> to vector<2x8xbf16>
    %c0_3 = arith.constant 0 : index
    %c0_4 = arith.constant 0 : index
    %4 = vector.load %arg3[%c0_3, %c0_4] : memref<32x1024xbf16, #tpu.memory_space<vmem>>, vector<32x1024xbf16>
    %cst = arith.constant dense<0.000000e+00> : vector<2x1024xf32>
    %5 = tpu.matmul %1, %4, %cst {dimension_numbers = #tpu.dot_dimension_numbers<[1], [0], [0], [1], [0, 0, 1, 1], [], []>} : vector<2x32xbf16>, vector<32x1024xbf16>, vector<2x1024xf32> -> vector<2x1024xf32>
    %c0_5 = arith.constant 0 : index
    %c0_6 = arith.constant 0 : index
    %6 = vector.load %arg4[%c0_5, %c0_6] : memref<1x1024xf32, #tpu.memory_space<vmem>>, vector<1x1024xf32>
    %7 = vector.broadcast %6 : vector<1x1024xf32> to vector<2x1024xf32>
    %8 = arith.addf %5, %7 : vector<2x1024xf32>
    %cst_7 = arith.constant 0.000000e+00 : f32
    %9 = vector.broadcast %cst_7 : f32 to vector<2x1024xf32>
    %10 = arith.maximumf %8, %9 : vector<2x1024xf32>
    %11 = arith.truncf %10 : vector<2x1024xf32> to vector<2x1024xbf16>
    %c0_8 = arith.constant 0 : index
    %c0_9 = arith.constant 0 : index
    %12 = vector.load %arg5[%c0_8, %c0_9] : memref<1024x512xbf16, #tpu.memory_space<vmem>>, vector<1024x512xbf16>
    %cst_10 = arith.constant dense<0.000000e+00> : vector<2x512xf32>
    %13 = tpu.matmul %11, %12, %cst_10 {dimension_numbers = #tpu.dot_dimension_numbers<[1], [0], [0], [1], [0, 0, 1, 1], [], []>} : vector<2x1024xbf16>, vector<1024x512xbf16>, vector<2x512xf32> -> vector<2x512xf32>
    %c0_11 = arith.constant 0 : index
    %c0_12 = arith.constant 0 : index
    %14 = vector.load %arg6[%c0_11, %c0_12] : memref<8x512xbf16, #tpu.memory_space<vmem>>, vector<8x512xbf16>
    %cst_13 = arith.constant dense<0.000000e+00> : vector<2x512xf32>
    %15 = tpu.matmul %3, %14, %cst_13 {dimension_numbers = #tpu.dot_dimension_numbers<[1], [0], [0], [1], [0, 0, 1, 1], [], []>} : vector<2x8xbf16>, vector<8x512xbf16>, vector<2x512xf32> -> vector<2x512xf32>
    %16 = arith.addf %13, %15 : vector<2x512xf32>
    %c0_14 = arith.constant 0 : index
    %c0_15 = arith.constant 0 : index
    %17 = vector.load %arg7[%c0_14, %c0_15] : memref<1x512xf32, #tpu.memory_space<vmem>>, vector<1x512xf32>
    %18 = vector.broadcast %17 : vector<1x512xf32> to vector<2x512xf32>
    %19 = arith.addf %16, %18 : vector<2x512xf32>
    %cst_16 = arith.constant 0.000000e+00 : f32
    %20 = vector.broadcast %cst_16 : f32 to vector<2x512xf32>
    %21 = arith.maximumf %19, %20 : vector<2x512xf32>
    %22 = arith.truncf %21 : vector<2x512xf32> to vector<2x512xbf16>
    %c0_17 = arith.constant 0 : index
    %c0_18 = arith.constant 0 : index
    %23 = vector.load %arg8[%c0_17, %c0_18] : memref<512x384xbf16, #tpu.memory_space<vmem>>, vector<512x384xbf16>
    %cst_19 = arith.constant dense<0.000000e+00> : vector<2x384xf32>
    %24 = tpu.matmul %22, %23, %cst_19 {dimension_numbers = #tpu.dot_dimension_numbers<[1], [0], [0], [1], [0, 0, 1, 1], [], []>} : vector<2x512xbf16>, vector<512x384xbf16>, vector<2x384xf32> -> vector<2x384xf32>
    %c0_20 = arith.constant 0 : index
    %c0_21 = arith.constant 0 : index
    %25 = vector.load %arg9[%c0_20, %c0_21] : memref<1x384xf32, #tpu.memory_space<vmem>>, vector<1x384xf32>
    %26 = vector.broadcast %25 : vector<1x384xf32> to vector<2x384xf32>
    %27 = arith.addf %24, %26 : vector<2x384xf32>
    %cst_22 = arith.constant 0.000000e+00 : f32
    %28 = vector.broadcast %cst_22 : f32 to vector<2x384xf32>
    %29 = arith.maximumf %27, %28 : vector<2x384xf32>
    %c0_23 = arith.constant 0 : index
    %c0_24 = arith.constant 0 : index
    %30 = vector.load %arg10[%c0_23, %c0_24] : memref<1x384xf32, #tpu.memory_space<vmem>>, vector<1x384xf32>
    %31 = vector.broadcast %30 : vector<1x384xf32> to vector<2x384xf32>
    %32 = arith.mulf %29, %31 : vector<2x384xf32>
    %cst_25 = arith.constant dense<0.000000e+00> : vector<2xf32>
    %33 = vector.multi_reduction <add>, %32, %cst_25 [1] : vector<2x384xf32> to vector<2xf32>
    %34 = vector.shape_cast %33 : vector<2xf32> to vector<2x1xf32>
    %c0_26 = arith.constant 0 : index
    %c0_27 = arith.constant 0 : index
    %35 = vector.load %arg11[%c0_26, %c0_27] : memref<1x1xf32, #tpu.memory_space<vmem>>, vector<1x1xf32>
    %36 = vector.broadcast %35 : vector<1x1xf32> to vector<2x1xf32>
    %37 = arith.addf %34, %36 : vector<2x1xf32>
    %c0_28 = arith.constant 0 : index
    %c0_29 = arith.constant 0 : index
    %38 = vector.load %arg12[%c0_28, %c0_29] : memref<2x1xf32, #tpu.memory_space<vmem>>, vector<2x1xf32>
    tpu.vector_store %arg12[%c0_28, %c0_29], %37 {strides = array<i32>} : memref<2x1xf32, #tpu.memory_space<vmem>>, vector<2x1xf32>,
    return
  }
  func.func @transform_0(%arg0: i32) -> (i32, i32) {
    %c0_i32 = arith.constant 0 : i32
    %c0_i32_0 = arith.constant 0 : i32
    return %arg0, %c0_i32 : i32, i32
  }
  func.func @transform_1(%arg0: i32) -> (i32, i32) {
    %c0_i32 = arith.constant 0 : i32
    %c0_i32_0 = arith.constant 0 : i32
    return %arg0, %c0_i32 : i32, i32
  }
  func.func @transform_2(%arg0: i32) -> (i32, i32) {
    %c0_i32 = arith.constant 0 : i32
    %c0_i32_0 = arith.constant 0 : i32
    %c0_i32_1 = arith.constant 0 : i32
    return %c0_i32, %c0_i32_0 : i32, i32
  }
  func.func @transform_3(%arg0: i32) -> (i32, i32) {
    %c0_i32 = arith.constant 0 : i32
    %c0_i32_0 = arith.constant 0 : i32
    %c0_i32_1 = arith.constant 0 : i32
    return %c0_i32, %c0_i32_0 : i32, i32
  }
  func.func @transform_4(%arg0: i32) -> (i32, i32) {
    %c0_i32 = arith.constant 0 : i32
    %c0_i32_0 = arith.constant 0 : i32
    %c0_i32_1 = arith.constant 0 : i32
    return %c0_i32, %c0_i32_0 : i32, i32
  }
  func.func @transform_5(%arg0: i32) -> (i32, i32) {
    %c0_i32 = arith.constant 0 : i32
    %c0_i32_0 = arith.constant 0 : i32
    %c0_i32_1 = arith.constant 0 : i32
    return %c0_i32, %c0_i32_0 : i32, i32
  }
  func.func @transform_6(%arg0: i32) -> (i32, i32) {
    %c0_i32 = arith.constant 0 : i32
    %c0_i32_0 = arith.constant 0 : i32
    %c0_i32_1 = arith.constant 0 : i32
    return %c0_i32, %c0_i32_0 : i32, i32
  }
  func.func @transform_7(%arg0: i32) -> (i32, i32) {
    %c0_i32 = arith.constant 0 : i32
    %c0_i32_0 = arith.constant 0 : i32
    %c0_i32_1 = arith.constant 0 : i32
    return %c0_i32, %c0_i32_0 : i32, i32
  }
  func.func @transform_8(%arg0: i32) -> (i32, i32) {
    %c0_i32 = arith.constant 0 : i32
    %c0_i32_0 = arith.constant 0 : i32
    %c0_i32_1 = arith.constant 0 : i32
    return %c0_i32, %c0_i32_0 : i32, i32
  }
  func.func @transform_9(%arg0: i32) -> (i32, i32) {
    %c0_i32 = arith.constant 0 : i32
    %c0_i32_0 = arith.constant 0 : i32
    %c0_i32_1 = arith.constant 0 : i32
    return %c0_i32, %c0_i32_0 : i32, i32
  }
  func.func @transform_10(%arg0: i32) -> (i32, i32) {
    %c0_i32 = arith.constant 0 : i32
    %c0_i32_0 = arith.constant 0 : i32
    %c0_i32_1 = arith.constant 0 : i32
    return %c0_i32, %c0_i32_0 : i32, i32
  }
  func.func @transform_11(%arg0: i32) -> (i32, i32) {
    %c0_i32 = arith.constant 0 : i32
    %c0_i32_0 = arith.constant 0 : i32
    return %arg0, %c0_i32 : i32, i32
  }
}

</mosaic_0001>

<llo_original>
// kernel: critic_forward.1
$region0: #{critic_forward.1}
  #allocation0 [shape = 'u32[]', space=smem, size = 0x4, offset = 0x4, fixed_abs, tag = 'smem constant byte address 0x4 - core index']
  #allocation1 [shape = 'u32[144,128]{1,0:T(1,128)}', space=vmem, size = 0x12000, scoped, tag = 'internal scratch']
  #allocation2 [shape = 'f32[1,1]{1,0:T(1,128)S(1)}', space=vmem, size = 0x200, scoped, tag = 'scoped memory for critic_forward.1']
  %s0 = inlined_call_operand.hbm [shape: f32[2,32], index: 0, kind: input, shape index: {}]
  %s1 = inlined_call_operand.hbm [shape: f32[2,8], index: 1, kind: input, shape index: {}]
  %s2 = inlined_call_operand.hbm [shape: bf16[32,1024], index: 2, kind: input, shape index: {}]
  %s3 = inlined_call_operand.hbm [shape: f32[1,1024], index: 3, kind: input, shape index: {}]
  %s4 = inlined_call_operand.hbm [shape: bf16[1024,512], index: 4, kind: input, shape index: {}]
  %s5 = inlined_call_operand.hbm [shape: bf16[8,512], index: 5, kind: input, shape index: {}]
  %s6 = inlined_call_operand.vmem [shape: f32[1,512], index: 6, kind: input, shape index: {}]
  %s7 = inlined_call_operand.hbm [shape: bf16[512,384], index: 7, kind: input, shape index: {}]
  %s8 = inlined_call_operand.vmem [shape: f32[1,384], index: 8, kind: input, shape index: {}]
  %s9 = inlined_call_operand.vmem [shape: f32[1,384], index: 9, kind: input, shape index: {}]
  %s10 = inlined_call_operand.<no memory space> [shape: f32[1,1], index: 10, kind: input, shape index: {}]
  %s11 = inlined_call_operand.vmem [shape: f32[2,1], index: 11, kind: output, shape index: {}]
  %s12 = sld [smem:[#allocation0]]
  $region82: #{critic_forward.1} parent=0
    _
  %s14 = ssub.s32 1, %s12
  %s15 = scalar_select 0, %s14, %s12
  %v16 = vstv %s10
  %17 = vst [vmem:[#allocation2] sm:$0x1] %v16
  $region1: #{critic_forward.1} parent=0
    #allocation3 [shape = 'u8[1024]{0}', space=vmem, size = 0x400, scoped, tag = 'input window, operand 0, single buffered']
    #allocation4 [shape = 's32[1]{0}', space=sflag, size = 0x4, scoped, tag = 'scoped memory for critic_forward.1']
    #allocation5 [shape = 'u8[1024]{0}', space=vmem, size = 0x400, scoped, tag = 'input window, operand 1, single buffered']
    #allocation6 [shape = 's32[1]{0}', space=sflag, size = 0x4, scoped, tag = 'scoped memory for critic_forward.1']
    #allocation7 [shape = 'u8[65536]{0}', space=vmem, size = 0x10000, scoped, tag = 'input window, operand 2, single buffered']
    #allocation8 [shape = 'u8[4096]{0}', space=vmem, size = 0x1000, scoped, tag = 'input window, operand 3, single buffered']
    #allocation9 [shape = 's32[1]{0}', space=sflag, size = 0x4, scoped, tag = 'scoped memory for critic_forward.1']
    #allocation10 [shape = 'u8[1048576]{0}', space=vmem, size = 0x100000, scoped, tag = 'input window, operand 4, single buffered']
    #allocation11 [shape = 'u8[8192]{0}', space=vmem, size = 0x2000, scoped, tag = 'input window, operand 5, single buffered']
    #allocation12 [shape = 's32[1]{0}', space=sflag, size = 0x4, scoped, tag = 'scoped memory for critic_forward.1']
    #allocation13 [shape = 'u8[393216]{0}', space=vmem, size = 0x60000, scoped, tag = 'input window, operand 7, single buffered']
    %18 = vsyncpa [#allocation4], 0
    %19 = vsyncpa [#allocation6], 0
    %20 = vsyncpa [#allocation9], 0
    %21 = vsyncpa [#allocation12], 0
    // Predicated region
    $region2: #{critic_forward.1} parent=1 // pred_check
      _
    $region3: #{critic_forward.1} parent=1 // pred_check_branch
      %23 = sbr.rel (0) target = $region5
    $region4: #{critic_forward.1} parent=1 // pred_region
      %s25 = ssub.s32 32, 32
      %26 = vsyncadd [#allocation4], %s25
      %s28 = sshll.u32 [#allocation3], 4
      %s29 = int_to_ptr.vmem [resolvable:$true] %s28
      %31 = dma.hbm_to_vmem [thread:$0]  %s0, 32, %s29, [#allocation4]
    $region5: #{critic_forward.1} parent=1 // pred_fallthru
      _
    // Predicated region
    $region6: #{critic_forward.1} parent=1 // pred_check
      _
    $region7: #{critic_forward.1} parent=1 // pred_check_branch
      %33 = sbr.rel (0) target = $region9
    $region8: #{critic_forward.1} parent=1 // pred_region
      %s35 = ssub.s32 32, 32
      %36 = vsyncadd [#allocation6], %s35
      %s38 = sshll.u32 [#allocation5], 4
      %s39 = int_to_ptr.vmem [resolvable:$true] %s38
      %41 = dma.hbm_to_vmem [thread:$0]  %s1, 32, %s39, [#allocation6]
    $region9: #{critic_forward.1} parent=1 // pred_fallthru
      _
    // Predicated region
    $region10: #{critic_forward.1} parent=1 // pred_check
      _
    $region11: #{critic_forward.1} parent=1 // pred_check_branch
      %43 = sbr.rel (0) target = $region13
    $region12: #{critic_forward.1} parent=1 // pred_region
      %s45 = ssub.s32 2048, 2048
      %46 = vsyncadd [#allocation6], %s45
      %s47 = sshll.u32 [#allocation7], 4
      %s48 = int_to_ptr.vmem [resolvable:$true] %s47
      %53 = dma.hbm_to_vmem [thread:$0]  %s2, 2048, %s48, [#allocation6], 512, 512, 32
    $region13: #{critic_forward.1} parent=1 // pred_fallthru
      _
    // Predicated region
    $region14: #{critic_forward.1} parent=1 // pred_check
      _
    $region15: #{critic_forward.1} parent=1 // pred_check_branch
      %55 = sbr.rel (0) target = $region17
    $region16: #{critic_forward.1} parent=1 // pred_region
      %s57 = ssub.s32 128, 128
      %58 = vsyncadd [#allocation9], %s57
      %s60 = sshll.u32 [#allocation8], 4
      %s61 = int_to_ptr.vmem [resolvable:$true] %s60
      %63 = dma.hbm_to_vmem [thread:$0]  %s3, 128, %s61, [#allocation9]
    $region17: #{critic_forward.1} parent=1 // pred_fallthru
      _
    // Predicated region
    $region18: #{critic_forward.1} parent=1 // pred_check
      _
    $region19: #{critic_forward.1} parent=1 // pred_check_branch
      %65 = sbr.rel (0) target = $region21
    $region20: #{critic_forward.1} parent=1 // pred_region
      %s67 = ssub.s32 32768, 32768
      %68 = vsyncadd [#allocation9], %s67
      %s69 = sshll.u32 [#allocation10], 4
      %s70 = int_to_ptr.vmem [resolvable:$true] %s69
      %75 = dma.hbm_to_vmem [thread:$0]  %s4, 32768, %s70, [#allocation9], 256, 256, 16
    $region21: #{critic_forward.1} parent=1 // pred_fallthru
      _
    // Predicated region
    $region22: #{critic_forward.1} parent=1 // pred_check
      _
    $region23: #{critic_forward.1} parent=1 // pred_check_branch
      %77 = sbr.rel (0) target = $region25
    $region24: #{critic_forward.1} parent=1 // pred_region
      %s79 = ssub.s32 256, 256
      %80 = vsyncadd [#allocation12], %s79
      %s82 = sshll.u32 [#allocation11], 4
      %s83 = int_to_ptr.vmem [resolvable:$true] %s82
      %85 = dma.hbm_to_vmem [thread:$0]  %s5, 256, %s83, [#allocation12]
    $region25: #{critic_forward.1} parent=1 // pred_fallthru
      _
    // Predicated region
    $region26: #{critic_forward.1} parent=1 // pred_check
      _
    $region27: #{critic_forward.1} parent=1 // pred_check_branch
      %87 = sbr.rel (0) target = $region29
    $region28: #{critic_forward.1} parent=1 // pred_region
      _
    $region29: #{critic_forward.1} parent=1 // pred_fallthru
      _
    // Predicated region
    $region30: #{critic_forward.1} parent=1 // pred_check
      _
    $region31: #{critic_forward.1} parent=1 // pred_check_branch
      %89 = sbr.rel (0) target = $region33
    $region32: #{critic_forward.1} parent=1 // pred_region
      %s91 = ssub.s32 12288, 12288
      %92 = vsyncadd [#allocation12], %s91
      %s93 = sshll.u32 [#allocation13], 4
      %s94 = int_to_ptr.vmem [resolvable:$true] %s93
      %99 = dma.hbm_to_vmem [thread:$0]  %s7, 12288, %s94, [#allocation12], 192, 192, 12
    $region33: #{critic_forward.1} parent=1 // pred_fallthru
      _
    // Predicated region
    $region34: #{critic_forward.1} parent=1 // pred_check
      _
    $region35: #{critic_forward.1} parent=1 // pred_check_branch
      %101 = sbr.rel (0) target = $region37
    $region36: #{critic_forward.1} parent=1 // pred_region
      _
    $region37: #{critic_forward.1} parent=1 // pred_fallthru
      _
    // Predicated region
    $region38: #{critic_forward.1} parent=1 // pred_check
      _
    $region39: #{critic_forward.1} parent=1 // pred_check_branch
      %103 = sbr.rel (0) target = $region41
    $region40: #{critic_forward.1} parent=1 // pred_region
      _
    $region41: #{critic_forward.1} parent=1 // pred_fallthru
      _
    // Predicated region
    $region42: #{critic_forward.1} parent=1 // pred_check
      _
    $region43: #{critic_forward.1} parent=1 // pred_check_branch
      %105 = sbr.rel (0) target = $region45
    $region44: #{critic_forward.1} parent=1 // pred_region
      _
    $region45: #{critic_forward.1} parent=1 // pred_fallthru
      _
    // Predicated region
    $region46: #{critic_forward.1} parent=1 // pred_check
      _
    $region47: #{critic_forward.1} parent=1 // pred_check_branch
      %107 = sbr.rel (0) target = $region49
    $region48: #{critic_forward.1} parent=1 // pred_region
      %108 = dma.done [#allocation4], 32
    $region49: #{critic_forward.1} parent=1 // pred_fallthru
      _
    // Predicated region
    $region50: #{critic_forward.1} parent=1 // pred_check
      _
    $region51: #{critic_forward.1} parent=1 // pred_check_branch
      %110 = sbr.rel (0) target = $region53
    $region52: #{critic_forward.1} parent=1 // pred_region
      %111 = dma.done [#allocation6], 32
    $region53: #{critic_forward.1} parent=1 // pred_fallthru
      _
    // Predicated region
    $region54: #{critic_forward.1} parent=1 // pred_check
      _
    $region55: #{critic_forward.1} parent=1 // pred_check_branch
      %113 = sbr.rel (0) target = $region57
    $region56: #{critic_forward.1} parent=1 // pred_region
      %114 = dma.done [#allocation6], 2048
    $region57: #{critic_forward.1} parent=1 // pred_fallthru
      _
    // Predicated region
    $region58: #{critic_forward.1} parent=1 // pred_check
      _
    $region59: #{critic_forward.1} parent=1 // pred_check_branch
      %116 = sbr.rel (0) target = $region61
    $region60: #{critic_forward.1} parent=1 // pred_region
      %117 = dma.done [#allocation9], 128
    $region61: #{critic_forward.1} parent=1 // pred_fallthru
      _
    // Predicated region
    $region62: #{critic_forward.1} parent=1 // pred_check
      _
    $region63: #{critic_forward.1} parent=1 // pred_check_branch
      %119 = sbr.rel (0) target = $region65
    $region64: #{critic_forward.1} parent=1 // pred_region
      %120 = dma.done [#allocation9], 32768
    $region65: #{critic_forward.1} parent=1 // pred_fallthru
      _
    // Predicated region
    $region66: #{critic_forward.1} parent=1 // pred_check
      _
    $region67: #{critic_forward.1} parent=1 // pred_check_branch
      %122 = sbr.rel (0) target = $region69
    $region68: #{critic_forward.1} parent=1 // pred_region
      %123 = dma.done [#allocation12], 256
    $region69: #{critic_forward.1} parent=1 // pred_fallthru
      _
    // Predicated region
    $region70: #{critic_forward.1} parent=1 // pred_check
      _
    $region71: #{critic_forward.1} parent=1 // pred_check_branch
      %125 = sbr.rel (0) target = $region73
    $region72: #{critic_forward.1} parent=1 // pred_region
      %126 = dma.done [#allocation12], 12288
    $region73: #{critic_forward.1} parent=1 // pred_fallthru
      _
    %v128 = vld [vmem:[#allocation3] sm:$0x3]
    %v129 = vpack.c.bf16 %v128, %v128
    %v130 = vld [vmem:[#allocation5] sm:$0x3]
    %v131 = vpack.c.bf16 %v130, %v130
    %v132 = vld [vmem:[#allocation7] sm:$0xff]
    %v133 = vld [vmem:[#allocation7 + $0x8] sm:$0xff]
    %v134 = vld [vmem:[#allocation7 + $0x10] sm:$0xff]
    %v135 = vld [vmem:[#allocation7 + $0x18] sm:$0xff]
    %v136 = vld [vmem:[#allocation7 + $0x20] sm:$0xff]
    %v137 = vld [vmem:[#allocation7 + $0x28] sm:$0xff]
    %v138 = vld [vmem:[#allocation7 + $0x30] sm:$0xff]
    %v139 = vld [vmem:[#allocation7 + $0x38] sm:$0xff]
    %v140 = vld [vmem:[#allocation7 + $0x40] sm:$0xff]
    %v141 = vld [vmem:[#allocation7 + $0x48] sm:$0xff]
    %v142 = vld [vmem:[#allocation7 + $0x50] sm:$0xff]
    %v143 = vld [vmem:[#allocation7 + $0x58] sm:$0xff]
    %v144 = vld [vmem:[#allocation7 + $0x60] sm:$0xff]
    %v145 = vld [vmem:[#allocation7 + $0x68] sm:$0xff]
    %v146 = vld [vmem:[#allocation7 + $0x70] sm:$0xff]
    %v147 = vld [vmem:[#allocation7 + $0x78] sm:$0xff]
    %v148 = vld [vmem:[#allocation8] sm:$0xff]
    %v150 = vlaneseq
    %v151 = vshrl.u32 %v150, 7
    %v152 = vsub.s32 0, %v151
    %v153 = vrot.slane %v148, %v152
    %v154 = vlaneseq
    %v155 = vshrl.u32 %v154, 7
    %v156 = vsub.s32 1, %v155
    %v157 = vrot.slane %v148, %v156
    %v158 = vlaneseq
    %v159 = vshrl.u32 %v158, 7
    %v160 = vsub.s32 2, %v159
    %v161 = vrot.slane %v148, %v160
    %v162 = vlaneseq
    %v163 = vshrl.u32 %v162, 7
    %v164 = vsub.s32 3, %v163
    %v165 = vrot.slane %v148, %v164
    %v166 = vlaneseq
    %v167 = vshrl.u32 %v166, 7
    %v168 = vsub.s32 4, %v167
    %v169 = vrot.slane %v148, %v168
    %v170 = vlaneseq
    %v171 = vshrl.u32 %v170, 7
    %v172 = vsub.s32 5, %v171
    %v173 = vrot.slane %v148, %v172
    %v174 = vlaneseq
    %v175 = vshrl.u32 %v174, 7
    %v176 = vsub.s32 6, %v175
    %v177 = vrot.slane %v148, %v176
    %v178 = vlaneseq
    %v179 = vshrl.u32 %v178, 7
    %v180 = vsub.s32 7, %v179
    %v181 = vrot.slane %v148, %v180
    %v206 = vunpack.c.l.b16 %v132
    %v207 = vunpack.c.h.b16 %v132
    %v208 = vunpack.c.l.b16 %v133
    %v209 = vunpack.c.h.b16 %v133
    %v210 = vunpack.c.l.b16 %v134
    %v211 = vunpack.c.h.b16 %v134
    %v212 = vunpack.c.l.b16 %v135
    %v213 = vunpack.c.h.b16 %v135
    %v214 = vunpack.c.l.b16 %v136
    %v215 = vunpack.c.h.b16 %v136
    %v216 = vunpack.c.l.b16 %v137
    %v217 = vunpack.c.h.b16 %v137
    %v218 = vunpack.c.l.b16 %v138
    %v219 = vunpack.c.h.b16 %v138
    %v220 = vunpack.c.l.b16 %v139
    %v221 = vunpack.c.h.b16 %v139
    %v222 = vunpack.c.l.b16 %v140
    %v223 = vunpack.c.h.b16 %v140
    %v224 = vunpack.c.l.b16 %v141
    %v225 = vunpack.c.h.b16 %v141
    %v226 = vunpack.c.l.b16 %v142
    %v227 = vunpack.c.h.b16 %v142
    %v228 = vunpack.c.l.b16 %v143
    %v229 = vunpack.c.h.b16 %v143
    %v230 = vunpack.c.l.b16 %v144
    %v231 = vunpack.c.h.b16 %v144
    %v232 = vunpack.c.l.b16 %v145
    %v233 = vunpack.c.h.b16 %v145
    %v234 = vunpack.c.l.b16 %v146
    %v235 = vunpack.c.h.b16 %v146
    %v236 = vunpack.c.l.b16 %v147
    %v237 = vunpack.c.h.b16 %v147
    %v238 = vpack.c.b16 %v214, %v206
    %v239 = vpack.c.b16 %v215, %v207
    %v240 = vpack.c.b16 %v216, %v208
    %v241 = vpack.c.b16 %v217, %v209
    %v242 = vpack.c.b16 %v218, %v210
    %v243 = vpack.c.b16 %v219, %v211
    %v244 = vpack.c.b16 %v220, %v212
    %v245 = vpack.c.b16 %v221, %v213
    %v246 = vpack.c.b16 %v230, %v222
    %v247 = vpack.c.b16 %v231, %v223
    %v248 = vpack.c.b16 %v232, %v224
    %v249 = vpack.c.b16 %v233, %v225
    %v250 = vpack.c.b16 %v234, %v226
    %v251 = vpack.c.b16 %v235, %v227
    %v252 = vpack.c.b16 %v236, %v228
    %v253 = vpack.c.b16 %v237, %v229
    %vm270 = vcmask 261120
    %v272 = vsel %vm270, %v129, 0
    %274 = vmatprep.subr.bf16.mxu0 0
    %275 = vmatpush1.bf16.msra.mxu0 0
    %276 = vmatprep.subr.bf16.mxu0 0
    %277 = vmatpush1.bf16.msra.mxu0 0
    %278 = vmatprep.subr.bf16.mxu0 0
    %279 = vmatpush1.bf16.msra.mxu0 0
    %280 = vmatprep.subr.bf16.mxu0 0
    %281 = vmatpush1.bf16.msra.mxu0 0
    %282 = vmatprep.subr.bf16.mxu0 0
    %283 = vmatpush1.bf16.msra.mxu0 0
    %284 = vmatprep.subr.bf16.mxu0 0
    %285 = vmatpush1.bf16.msra.mxu0 0
    %286 = vmatprep.subr.bf16.mxu0 %v247
    %287 = vmatpush1.bf16.msra.mxu0 %v246
    %288 = vmatprep.subr.bf16.mxu0 %v239
    %289 = vmatpush1.bf16.msra.mxu0 %v238
    %290 = vmatprep.subr.bf16.mxu0 0
    %291 = vmatpush2.bf16.msra.mxu0 0
    %292 = vmatprep.subr.bf16.mxu0 0
    %293 = vmatpush2.bf16.msra.mxu0 0
    %294 = vmatprep.subr.bf16.mxu0 0
    %295 = vmatpush2.bf16.msra.mxu0 0
    %296 = vmatprep.subr.bf16.mxu0 0
    %297 = vmatpush2.bf16.msra.mxu0 0
    %298 = vmatprep.subr.bf16.mxu0 0
    %299 = vmatpush2.bf16.msra.mxu0 0
    %300 = vmatprep.subr.bf16.mxu0 0
    %301 = vmatpush2.bf16.msra.mxu0 0
    %302 = vmatprep.subr.bf16.mxu0 0
    %303 = vmatpush2.bf16.msra.mxu0 0
    %304 = vmatprep.subr.bf16.mxu0 0
    %305 = vmatpush2.bf16.msra.mxu0 0
    %306 = vmatprep.mubr.bf16.mxu0 0
    %307 = vmatmul.mubr.bf16.gmra.mxu0 %v272
    %v308 = vpop.f32.mrf.mxu0
    %v309 = vadd.f32 %v153, %v308
    %v310 = vpop.f32.mrf.mxu0
    %v311 = vadd.f32 %v157, %v310
    %v312 = vpop.f32.mrf.mxu0
    %v313 = vpop.f32.mrf.mxu0
    %314 = vdwg.mxu0
    %315 = vmatprep.subr.bf16.mxu0 0
    %316 = vmatpush1.bf16.msra.mxu0 0
    %317 = vmatprep.subr.bf16.mxu0 0
    %318 = vmatpush1.bf16.msra.mxu0 0
    %319 = vmatprep.subr.bf16.mxu0 0
    %320 = vmatpush1.bf16.msra.mxu0 0
    %321 = vmatprep.subr.bf16.mxu0 0
    %322 = vmatpush1.bf16.msra.mxu0 0
    %323 = vmatprep.subr.bf16.mxu0 0
    %324 = vmatpush1.bf16.msra.mxu0 0
    %325 = vmatprep.subr.bf16.mxu0 0
    %326 = vmatpush1.bf16.msra.mxu0 0
    %327 = vmatprep.subr.bf16.mxu0 %v249
    %328 = vmatpush1.bf16.msra.mxu0 %v248
    %329 = vmatprep.subr.bf16.mxu0 %v241
    %330 = vmatpush1.bf16.msra.mxu0 %v240
    %331 = vmatprep.subr.bf16.mxu0 0
    %332 = vmatpush2.bf16.msra.mxu0 0
    %333 = vmatprep.subr.bf16.mxu0 0
    %334 = vmatpush2.bf16.msra.mxu0 0
    %335 = vmatprep.subr.bf16.mxu0 0
    %336 = vmatpush2.bf16.msra.mxu0 0
    %337 = vmatprep.subr.bf16.mxu0 0
    %338 = vmatpush2.bf16.msra.mxu0 0
    %339 = vmatprep.subr.bf16.mxu0 0
    %340 = vmatpush2.bf16.msra.mxu0 0
    %341 = vmatprep.subr.bf16.mxu0 0
    %342 = vmatpush2.bf16.msra.mxu0 0
    %343 = vmatprep.subr.bf16.mxu0 0
    %344 = vmatpush2.bf16.msra.mxu0 0
    %345 = vmatprep.subr.bf16.mxu0 0
    %346 = vmatpush2.bf16.msra.mxu0 0
    %347 = vmatprep.mubr.bf16.mxu0 0
    %348 = vmatmul.mubr.bf16.gmra.mxu0 %v272
    %v349 = vpop.f32.mrf.mxu0
    %v350 = vadd.f32 %v161, %v349
    %v351 = vpop.f32.mrf.mxu0
    %v352 = vadd.f32 %v165, %v351
    %v353 = vpop.f32.mrf.mxu0
    %v354 = vpop.f32.mrf.mxu0
    %355 = vdwg.mxu0
    %356 = vmatprep.subr.bf16.mxu0 0
    %357 = vmatpush1.bf16.msra.mxu0 0
    %358 = vmatprep.subr.bf16.mxu0 0
    %359 = vmatpush1.bf16.msra.mxu0 0
    %360 = vmatprep.subr.bf16.mxu0 0
    %361 = vmatpush1.bf16.msra.mxu0 0
    %362 = vmatprep.subr.bf16.mxu0 0
    %363 = vmatpush1.bf16.msra.mxu0 0
    %364 = vmatprep.subr.bf16.mxu0 0
    %365 = vmatpush1.bf16.msra.mxu0 0
    %366 = vmatprep.subr.bf16.mxu0 0
    %367 = vmatpush1.bf16.msra.mxu0 0
    %368 = vmatprep.subr.bf16.mxu0 %v251
    %369 = vmatpush1.bf16.msra.mxu0 %v250
    %370 = vmatprep.subr.bf16.mxu0 %v243
    %371 = vmatpush1.bf16.msra.mxu0 %v242
    %372 = vmatprep.subr.bf16.mxu0 0
    %373 = vmatpush2.bf16.msra.mxu0 0
    %374 = vmatprep.subr.bf16.mxu0 0
    %375 = vmatpush2.bf16.msra.mxu0 0
    %376 = vmatprep.subr.bf16.mxu0 0
    %377 = vmatpush2.bf16.msra.mxu0 0
    %378 = vmatprep.subr.bf16.mxu0 0
    %379 = vmatpush2.bf16.msra.mxu0 0
    %380 = vmatprep.subr.bf16.mxu0 0
    %381 = vmatpush2.bf16.msra.mxu0 0
    %382 = vmatprep.subr.bf16.mxu0 0
    %383 = vmatpush2.bf16.msra.mxu0 0
    %384 = vmatprep.subr.bf16.mxu0 0
    %385 = vmatpush2.bf16.msra.mxu0 0
    %386 = vmatprep.subr.bf16.mxu0 0
    %387 = vmatpush2.bf16.msra.mxu0 0
    %388 = vmatprep.mubr.bf16.mxu0 0
    %389 = vmatmul.mubr.bf16.gmra.mxu0 %v272
    %v390 = vpop.f32.mrf.mxu0
    %v391 = vadd.f32 %v169, %v390
    %v392 = vpop.f32.mrf.mxu0
    %v393 = vadd.f32 %v173, %v392
    %v394 = vpop.f32.mrf.mxu0
    %v395 = vpop.f32.mrf.mxu0
    %396 = vdwg.mxu0
    %397 = vmatprep.subr.bf16.mxu0 0
    %398 = vmatpush1.bf16.msra.mxu0 0
    %399 = vmatprep.subr.bf16.mxu0 0
    %400 = vmatpush1.bf16.msra.mxu0 0
    %401 = vmatprep.subr.bf16.mxu0 0
    %402 = vmatpush1.bf16.msra.mxu0 0
    %403 = vmatprep.subr.bf16.mxu0 0
    %404 = vmatpush1.bf16.msra.mxu0 0
    %405 = vmatprep.subr.bf16.mxu0 0
    %406 = vmatpush1.bf16.msra.mxu0 0
    %407 = vmatprep.subr.bf16.mxu0 0
    %408 = vmatpush1.bf16.msra.mxu0 0
    %409 = vmatprep.subr.bf16.mxu0 %v253
    %410 = vmatpush1.bf16.msra.mxu0 %v252
    %411 = vmatprep.subr.bf16.mxu0 %v245
    %412 = vmatpush1.bf16.msra.mxu0 %v244
    %413 = vmatprep.subr.bf16.mxu0 0
    %414 = vmatpush2.bf16.msra.mxu0 0
    %415 = vmatprep.subr.bf16.mxu0 0
    %416 = vmatpush2.bf16.msra.mxu0 0
    %417 = vmatprep.subr.bf16.mxu0 0
    %418 = vmatpush2.bf16.msra.mxu0 0
    %419 = vmatprep.subr.bf16.mxu0 0
    %420 = vmatpush2.bf16.msra.mxu0 0
    %421 = vmatprep.subr.bf16.mxu0 0
    %422 = vmatpush2.bf16.msra.mxu0 0
    %423 = vmatprep.subr.bf16.mxu0 0
    %424 = vmatpush2.bf16.msra.mxu0 0
    %425 = vmatprep.subr.bf16.mxu0 0
    %426 = vmatpush2.bf16.msra.mxu0 0
    %427 = vmatprep.subr.bf16.mxu0 0
    %428 = vmatpush2.bf16.msra.mxu0 0
    %429 = vmatprep.mubr.bf16.mxu0 0
    %430 = vmatmul.mubr.bf16.gmra.mxu0 %v272
    %v431 = vpop.f32.mrf.mxu0
    %v432 = vadd.f32 %v177, %v431
    %v433 = vpop.f32.mrf.mxu0
    %v434 = vadd.f32 %v181, %v433
    %v435 = vpop.f32.mrf.mxu0
    %v436 = vpop.f32.mrf.mxu0
    %437 = vdwg.mxu0
    %v438 = vmax.f32 %v309, 0.0
    %v439 = vmax.f32 %v311, 0.0
    %v440 = vmax.f32 %v350, 0.0
    %v441 = vmax.f32 %v352, 0.0
    %v442 = vmax.f32 %v391, 0.0
    %v443 = vmax.f32 %v393, 0.0
    %v444 = vmax.f32 %v432, 0.0
    %v445 = vmax.f32 %v434, 0.0
    %v446 = vpack.c.bf16 %v438, %v438
    %v447 = vpack.c.bf16 %v439, %v439
    %v448 = vpack.c.bf16 %v440, %v440
    %v449 = vpack.c.bf16 %v441, %v441
    %v450 = vpack.c.bf16 %v442, %v442
    %v451 = vpack.c.bf16 %v443, %v443
    %v452 = vpack.c.bf16 %v444, %v444
    %v453 = vpack.c.bf16 %v445, %v445
    %v454 = vld [vmem:[#allocation10] sm:$0xff]
    %v455 = vld [vmem:[#allocation10 + $0x8] sm:$0xff]
    %v456 = vld [vmem:[#allocation10 + $0x10] sm:$0xff]
    %v457 = vld [vmem:[#allocation10 + $0x18] sm:$0xff]
    %v458 = vld [vmem:[#allocation10 + $0x20] sm:$0xff]
    %v459 = vld [vmem:[#allocation10 + $0x28] sm:$0xff]
    %v460 = vld [vmem:[#allocation10 + $0x30] sm:$0xff]
    %v461 = vld [vmem:[#allocation10 + $0x38] sm:$0xff]
    %v462 = vld [vmem:[#allocation10 + $0x40] sm:$0xff]
    %v463 = vld [vmem:[#allocation10 + $0x48] sm:$0xff]
    %v464 = vld [vmem:[#allocation10 + $0x50] sm:$0xff]
    %v465 = vld [vmem:[#allocation10 + $0x58] sm:$0xff]
    %v466 = vld [vmem:[#allocation10 + $0x60] sm:$0xff]
    %v467 = vld [vmem:[#allocation10 + $0x68] sm:$0xff]
    %v468 = vld [vmem:[#allocation10 + $0x70] sm:$0xff]
    %v469 = vld [vmem:[#allocation10 + $0x78] sm:$0xff]
    %v470 = vld [vmem:[#allocation10 + $0x80] sm:$0xff]
    %v471 = vld [vmem:[#allocation10 + $0x88] sm:$0xff]
    %v472 = vld [vmem:[#allocation10 + $0x90] sm:$0xff]
    %v473 = vld [vmem:[#allocation10 + $0x98] sm:$0xff]
    %v474 = vld [vmem:[#allocation10 + $0xa0] sm:$0xff]
    %v475 = vld [vmem:[#allocation10 + $0xa8] sm:$0xff]
    %v476 = vld [vmem:[#allocation10 + $0xb0] sm:$0xff]
    %v477 = vld [vmem:[#allocation10 + $0xb8] sm:$0xff]
    %v478 = vld [vmem:[#allocation10 + $0xc0] sm:$0xff]
    %v479 = vld [vmem:[#allocation10 + $0xc8] sm:$0xff]
    %v480 = vld [vmem:[#allocation10 + $0xd0] sm:$0xff]
    %v481 = vld [vmem:[#allocation10 + $0xd8] sm:$0xff]
    %v482 = vld [vmem:[#allocation10 + $0xe0] sm:$0xff]
    %v483 = vld [vmem:[#allocation10 + $0xe8] sm:$0xff]
    %v484 = vld [vmem:[#allocation10 + $0xf0] sm:$0xff]
    %v485 = vld [vmem:[#allocation10 + $0xf8] sm:$0xff]
    %v486 = vld [vmem:[#allocation10 + $0x100] sm:$0xff]
    %v487 = vld [vmem:[#allocation10 + $0x108] sm:$0xff]
    %v488 = vld [vmem:[#allocation10 + $0x110] sm:$0xff]
    %v489 = vld [vmem:[#allocation10 + $0x118] sm:$0xff]
    %v490 = vld [vmem:[#allocation10 + $0x120] sm:$0xff]
    %v491 = vld [vmem:[#allocation10 + $0x128] sm:$0xff]
    %v492 = vld [vmem:[#allocation10 + $0x130] sm:$0xff]
    %v493 = vld [vmem:[#allocation10 + $0x138] sm:$0xff]
    %v494 = vld [vmem:[#allocation10 + $0x140] sm:$0xff]
    %v495 = vld [vmem:[#allocation10 + $0x148] sm:$0xff]
    %v496 = vld [vmem:[#allocation10 + $0x150] sm:$0xff]
    %v497 = vld [vmem:[#allocation10 + $0x158] sm:$0xff]
    %v498 = vld [vmem:[#allocation10 + $0x160] sm:$0xff]
    %v499 = vld [vmem:[#allocation10 + $0x168] sm:$0xff]
    %v500 = vld [vmem:[#allocation10 + $0x170] sm:$0xff]
    %v501 = vld [vmem:[#allocation10 + $0x178] sm:$0xff]
    %v502 = vld [vmem:[#allocation10 + $0x180] sm:$0xff]
    %v503 = vld [vmem:[#allocation10 + $0x188] sm:$0xff]
    %v504 = vld [vmem:[#allocation10 + $0x190] sm:$0xff]
    %v505 = vld [vmem:[#allocation10 + $0x198] sm:$0xff]
    %v506 = vld [vmem:[#allocation10 + $0x1a0] sm:$0xff]
    %v507 = vld [vmem:[#allocation10 + $0x1a8] sm:$0xff]
    %v508 = vld [vmem:[#allocation10 + $0x1b0] sm:$0xff]
    %v509 = vld [vmem:[#allocation10 + $0x1b8] sm:$0xff]
    %v510 = vld [vmem:[#allocation10 + $0x1c0] sm:$0xff]
    %v511 = vld [vmem:[#allocation10 + $0x1c8] sm:$0xff]
    %v512 = vld [vmem:[#allocation10 + $0x1d0] sm:$0xff]
    %v513 = vld [vmem:[#allocation10 + $0x1d8] sm:$0xff]
    %v514 = vld [vmem:[#allocation10 + $0x1e0] sm:$0xff]
    %v515 = vld [vmem:[#allocation10 + $0x1e8] sm:$0xff]
    %v516 = vld [vmem:[#allocation10 + $0x1f0] sm:$0xff]
    %v517 = vld [vmem:[#allocation10 + $0x1f8] sm:$0xff]
    %v518 = vld [vmem:[#allocation10 + $0x200] sm:$0xff]
    %v519 = vld [vmem:[#allocation10 + $0x208] sm:$0xff]
    %v520 = vld [vmem:[#allocation10 + $0x210] sm:$0xff]
    %v521 = vld [vmem:[#allocation10 + $0x218] sm:$0xff]
    %v522 = vld [vmem:[#allocation10 + $0x220] sm:$0xff]
    %v523 = vld [vmem:[#allocation10 + $0x228] sm:$0xff]
    %v524 = vld [vmem:[#allocation10 + $0x230] sm:$0xff]
    %v525 = vld [vmem:[#allocation10 + $0x238] sm:$0xff]
    %v526 = vld [vmem:[#allocation10 + $0x240] sm:$0xff]
    %v527 = vld [vmem:[#allocation10 + $0x248] sm:$0xff]
    %v528 = vld [vmem:[#allocation10 + $0x250] sm:$0xff]
    %v529 = vld [vmem:[#allocation10 + $0x258] sm:$0xff]
    %v530 = vld [vmem:[#allocation10 + $0x260] sm:$0xff]
    %v531 = vld [vmem:[#allocation10 + $0x268] sm:$0xff]
    %v532 = vld [vmem:[#allocation10 + $0x270] sm:$0xff]
    %v533 = vld [vmem:[#allocation10 + $0x278] sm:$0xff]
    %v534 = vld [vmem:[#allocation10 + $0x280] sm:$0xff]
    %v535 = vld [vmem:[#allocation10 + $0x288] sm:$0xff]
    %v536 = vld [vmem:[#allocation10 + $0x290] sm:$0xff]
    %v537 = vld [vmem:[#allocation10 + $0x298] sm:$0xff]
    %v538 = vld [vmem:[#allocation10 + $0x2a0] sm:$0xff]
    %v539 = vld [vmem:[#allocation10 + $0x2a8] sm:$0xff]
    %v540 = vld [vmem:[#allocation10 + $0x2b0] sm:$0xff]
    %v541 = vld [vmem:[#allocation10 + $0x2b8] sm:$0xff]
    %v542 = vld [vmem:[#allocation10 + $0x2c0] sm:$0xff]
    %v543 = vld [vmem:[#allocation10 + $0x2c8] sm:$0xff]
    %v544 = vld [vmem:[#allocation10 + $0x2d0] sm:$0xff]
    %v545 = vld [vmem:[#allocation10 + $0x2d8] sm:$0xff]
    %v546 = vld [vmem:[#allocation10 + $0x2e0] sm:$0xff]
    %v547 = vld [vmem:[#allocation10 + $0x2e8] sm:$0xff]
    %v548 = vld [vmem:[#allocation10 + $0x2f0] sm:$0xff]
    %v549 = vld [vmem:[#allocation10 + $0x2f8] sm:$0xff]
    %v550 = vld [vmem:[#allocation10 + $0x300] sm:$0xff]
    %v551 = vld [vmem:[#allocation10 + $0x308] sm:$0xff]
    %v552 = vld [vmem:[#allocation10 + $0x310] sm:$0xff]
    %v553 = vld [vmem:[#allocation10 + $0x318] sm:$0xff]
    %v554 = vld [vmem:[#allocation10 + $0x320] sm:$0xff]
    %v555 = vld [vmem:[#allocation10 + $0x328] sm:$0xff]
    %v556 = vld [vmem:[#allocation10 + $0x330] sm:$0xff]
    %v557 = vld [vmem:[#allocation10 + $0x338] sm:$0xff]
    %v558 = vld [vmem:[#allocation10 + $0x340] sm:$0xff]
    %v559 = vld [vmem:[#allocation10 + $0x348] sm:$0xff]
    %v560 = vld [vmem:[#allocation10 + $0x350] sm:$0xff]
    %v561 = vld [vmem:[#allocation10 + $0x358] sm:$0xff]
    %v562 = vld [vmem:[#allocation10 + $0x360] sm:$0xff]
    %v563 = vld [vmem:[#allocation10 + $0x368] sm:$0xff]
    %v564 = vld [vmem:[#allocation10 + $0x370] sm:$0xff]
    %v565 = vld [vmem:[#allocation10 + $0x378] sm:$0xff]
    %v566 = vld [vmem:[#allocation10 + $0x380] sm:$0xff]
    %v567 = vld [vmem:[#allocation10 + $0x388] sm:$0xff]
    %v568 = vld [vmem:[#allocation10 + $0x390] sm:$0xff]
    %v569 = vld [vmem:[#allocation10 + $0x398] sm:$0xff]
    %v570 = vld [vmem:[#allocation10 + $0x3a0] sm:$0xff]
    %v571 = vld [vmem:[#allocation10 + $0x3a8] sm:$0xff]
    %v572 = vld [vmem:[#allocation10 + $0x3b0] sm:$0xff]
    %v573 = vld [vmem:[#allocation10 + $0x3b8] sm:$0xff]
    %v574 = vld [vmem:[#allocation10 + $0x3c0] sm:$0xff]
    %v575 = vld [vmem:[#allocation10 + $0x3c8] sm:$0xff]
    %v576 = vld [vmem:[#allocation10 + $0x3d0] sm:$0xff]
    %v577 = vld [vmem:[#allocation10 + $0x3d8] sm:$0xff]
    %v578 = vld [vmem:[#allocation10 + $0x3e0] sm:$0xff]
    %v579 = vld [vmem:[#allocation10 + $0x3e8] sm:$0xff]
    %v580 = vld [vmem:[#allocation10 + $0x3f0] sm:$0xff]
    %v581 = vld [vmem:[#allocation10 + $0x3f8] sm:$0xff]
    %v582 = vld [vmem:[#allocation10 + $0x400] sm:$0xff]
    %v583 = vld [vmem:[#allocation10 + $0x408] sm:$0xff]
    %v584 = vld [vmem:[#allocation10 + $0x410] sm:$0xff]
    %v585 = vld [vmem:[#allocation10 + $0x418] sm:$0xff]
    %v586 = vld [vmem:[#allocation10 + $0x420] sm:$0xff]
    %v587 = vld [vmem:[#allocation10 + $0x428] sm:$0xff]
    %v588 = vld [vmem:[#allocation10 + $0x430] sm:$0xff]
    %v589 = vld [vmem:[#allocation10 + $0x438] sm:$0xff]
    %v590 = vld [vmem:[#allocation10 + $0x440] sm:$0xff]
    %v591 = vld [vmem:[#allocation10 + $0x448] sm:$0xff]
    %v592 = vld [vmem:[#allocation10 + $0x450] sm:$0xff]
    %v593 = vld [vmem:[#allocation10 + $0x458] sm:$0xff]
    %v594 = vld [vmem:[#allocation10 + $0x460] sm:$0xff]
    %v595 = vld [vmem:[#allocation10 + $0x468] sm:$0xff]
    %v596 = vld [vmem:[#allocation10 + $0x470] sm:$0xff]
    %v597 = vld [vmem:[#allocation10 + $0x478] sm:$0xff]
    %v598 = vld [vmem:[#allocation10 + $0x480] sm:$0xff]
    %v599 = vld [vmem:[#allocation10 + $0x488] sm:$0xff]
    %v600 = vld [vmem:[#allocation10 + $0x490] sm:$0xff]
    %v601 = vld [vmem:[#allocation10 + $0x498] sm:$0xff]
    %v602 = vld [vmem:[#allocation10 + $0x4a0] sm:$0xff]
    %v603 = vld [vmem:[#allocation10 + $0x4a8] sm:$0xff]
    %v604 = vld [vmem:[#allocation10 + $0x4b0] sm:$0xff]
    %v605 = vld [vmem:[#allocation10 + $0x4b8] sm:$0xff]
    %v606 = vld [vmem:[#allocation10 + $0x4c0] sm:$0xff]
    %v607 = vld [vmem:[#allocation10 + $0x4c8] sm:$0xff]
    %v608 = vld [vmem:[#allocation10 + $0x4d0] sm:$0xff]
    %v609 = vld [vmem:[#allocation10 + $0x4d8] sm:$0xff]
    %v610 = vld [vmem:[#allocation10 + $0x4e0] sm:$0xff]
    %v611 = vld [vmem:[#allocation10 + $0x4e8] sm:$0xff]
    %v612 = vld [vmem:[#allocation10 + $0x4f0] sm:$0xff]
    %v613 = vld [vmem:[#allocation10 + $0x4f8] sm:$0xff]
    %v614 = vld [vmem:[#allocation10 + $0x500] sm:$0xff]
    %v615 = vld [vmem:[#allocation10 + $0x508] sm:$0xff]
    %v616 = vld [vmem:[#allocation10 + $0x510] sm:$0xff]
    %v617 = vld [vmem:[#allocation10 + $0x518] sm:$0xff]
    %v618 = vld [vmem:[#allocation10 + $0x520] sm:$0xff]
    %v619 = vld [vmem:[#allocation10 + $0x528] sm:$0xff]
    %v620 = vld [vmem:[#allocation10 + $0x530] sm:$0xff]
    %v621 = vld [vmem:[#allocation10 + $0x538] sm:$0xff]
    %v622 = vld [vmem:[#allocation10 + $0x540] sm:$0xff]
    %v623 = vld [vmem:[#allocation10 + $0x548] sm:$0xff]
    %v624 = vld [vmem:[#allocation10 + $0x550] sm:$0xff]
    %v625 = vld [vmem:[#allocation10 + $0x558] sm:$0xff]
    %v626 = vld [vmem:[#allocation10 + $0x560] sm:$0xff]
    %v627 = vld [vmem:[#allocation10 + $0x568] sm:$0xff]
    %v628 = vld [vmem:[#allocation10 + $0x570] sm:$0xff]
    %v629 = vld [vmem:[#allocation10 + $0x578] sm:$0xff]
    %v630 = vld [vmem:[#allocation10 + $0x580] sm:$0xff]
    %v631 = vld [vmem:[#allocation10 + $0x588] sm:$0xff]
    %v632 = vld [vmem:[#allocation10 + $0x590] sm:$0xff]
    %v633 = vld [vmem:[#allocation10 + $0x598] sm:$0xff]
    %v634 = vld [vmem:[#allocation10 + $0x5a0] sm:$0xff]
    %v635 = vld [vmem:[#allocation10 + $0x5a8] sm:$0xff]
    %v636 = vld [vmem:[#allocation10 + $0x5b0] sm:$0xff]
    %v637 = vld [vmem:[#allocation10 + $0x5b8] sm:$0xff]
    %v638 = vld [vmem:[#allocation10 + $0x5c0] sm:$0xff]
    %v639 = vld [vmem:[#allocation10 + $0x5c8] sm:$0xff]
    %v640 = vld [vmem:[#allocation10 + $0x5d0] sm:$0xff]
    %v641 = vld [vmem:[#allocation10 + $0x5d8] sm:$0xff]
    %v642 = vld [vmem:[#allocation10 + $0x5e0] sm:$0xff]
    %v643 = vld [vmem:[#allocation10 + $0x5e8] sm:$0xff]
    %v644 = vld [vmem:[#allocation10 + $0x5f0] sm:$0xff]
    %v645 = vld [vmem:[#allocation10 + $0x5f8] sm:$0xff]
    %v646 = vld [vmem:[#allocation10 + $0x600] sm:$0xff]
    %v647 = vld [vmem:[#allocation10 + $0x608] sm:$0xff]
    %v648 = vld [vmem:[#allocation10 + $0x610] sm:$0xff]
    %v649 = vld [vmem:[#allocation10 + $0x618] sm:$0xff]
    %v650 = vld [vmem:[#allocation10 + $0x620] sm:$0xff]
    %v651 = vld [vmem:[#allocation10 + $0x628] sm:$0xff]
    %v652 = vld [vmem:[#allocation10 + $0x630] sm:$0xff]
    %v653 = vld [vmem:[#allocation10 + $0x638] sm:$0xff]
    %v654 = vld [vmem:[#allocation10 + $0x640] sm:$0xff]
    %v655 = vld [vmem:[#allocation10 + $0x648] sm:$0xff]
    %v656 = vld [vmem:[#allocation10 + $0x650] sm:$0xff]
    %v657 = vld [vmem:[#allocation10 + $0x658] sm:$0xff]
    %v658 = vld [vmem:[#allocation10 + $0x660] sm:$0xff]
    %v659 = vld [vmem:[#allocation10 + $0x668] sm:$0xff]
    %v660 = vld [vmem:[#allocation10 + $0x670] sm:$0xff]
    %v661 = vld [vmem:[#allocation10 + $0x678] sm:$0xff]
    %v662 = vld [vmem:[#allocation10 + $0x680] sm:$0xff]
    %v663 = vld [vmem:[#allocation10 + $0x688] sm:$0xff]
    %v664 = vld [vmem:[#allocation10 + $0x690] sm:$0xff]
    %v665 = vld [vmem:[#allocation10 + $0x698] sm:$0xff]
    %v666 = vld [vmem:[#allocation10 + $0x6a0] sm:$0xff]
    %v667 = vld [vmem:[#allocation10 + $0x6a8] sm:$0xff]
    %v668 = vld [vmem:[#allocation10 + $0x6b0] sm:$0xff]
    %v669 = vld [vmem:[#allocation10 + $0x6b8] sm:$0xff]
    %v670 = vld [vmem:[#allocation10 + $0x6c0] sm:$0xff]
    %v671 = vld [vmem:[#allocation10 + $0x6c8] sm:$0xff]
    %v672 = vld [vmem:[#allocation10 + $0x6d0] sm:$0xff]
    %v673 = vld [vmem:[#allocation10 + $0x6d8] sm:$0xff]
    %v674 = vld [vmem:[#allocation10 + $0x6e0] sm:$0xff]
    %v675 = vld [vmem:[#allocation10 + $0x6e8] sm:$0xff]
    %v676 = vld [vmem:[#allocation10 + $0x6f0] sm:$0xff]
    %v677 = vld [vmem:[#allocation10 + $0x6f8] sm:$0xff]
    %v678 = vld [vmem:[#allocation10 + $0x700] sm:$0xff]
    %v679 = vld [vmem:[#allocation10 + $0x708] sm:$0xff]
    %v680 = vld [vmem:[#allocation10 + $0x710] sm:$0xff]
    %v681 = vld [vmem:[#allocation10 + $0x718] sm:$0xff]
    %v682 = vld [vmem:[#allocation10 + $0x720] sm:$0xff]
    %v683 = vld [vmem:[#allocation10 + $0x728] sm:$0xff]
    %v684 = vld [vmem:[#allocation10 + $0x730] sm:$0xff]
    %v685 = vld [vmem:[#allocation10 + $0x738] sm:$0xff]
    %v686 = vld [vmem:[#allocation10 + $0x740] sm:$0xff]
    %v687 = vld [vmem:[#allocation10 + $0x748] sm:$0xff]
    %v688 = vld [vmem:[#allocation10 + $0x750] sm:$0xff]
    %v689 = vld [vmem:[#allocation10 + $0x758] sm:$0xff]
    %v690 = vld [vmem:[#allocation10 + $0x760] sm:$0xff]
    %v691 = vld [vmem:[#allocation10 + $0x768] sm:$0xff]
    %v692 = vld [vmem:[#allocation10 + $0x770] sm:$0xff]
    %v693 = vld [vmem:[#allocation10 + $0x778] sm:$0xff]
    %v694 = vld [vmem:[#allocation10 + $0x780] sm:$0xff]
    %v695 = vld [vmem:[#allocation10 + $0x788] sm:$0xff]
    %v696 = vld [vmem:[#allocation10 + $0x790] sm:$0xff]
    %v697 = vld [vmem:[#allocation10 + $0x798] sm:$0xff]
    %v698 = vld [vmem:[#allocation10 + $0x7a0] sm:$0xff]
    %v699 = vld [vmem:[#allocation10 + $0x7a8] sm:$0xff]
    %v700 = vld [vmem:[#allocation10 + $0x7b0] sm:$0xff]
    %v701 = vld [vmem:[#allocation10 + $0x7b8] sm:$0xff]
    %v702 = vld [vmem:[#allocation10 + $0x7c0] sm:$0xff]
    %v703 = vld [vmem:[#allocation10 + $0x7c8] sm:$0xff]
    %v704 = vld [vmem:[#allocation10 + $0x7d0] sm:$0xff]
    %v705 = vld [vmem:[#allocation10 + $0x7d8] sm:$0xff]
    %v706 = vld [vmem:[#allocation10 + $0x7e0] sm:$0xff]
    %v707 = vld [vmem:[#allocation10 + $0x7e8] sm:$0xff]
    %v708 = vld [vmem:[#allocation10 + $0x7f0] sm:$0xff]
    %v709 = vld [vmem:[#allocation10 + $0x7f8] sm:$0xff]
    %v710 = vld [vmem:[#allocation11] sm:$0xff]
    %v711 = vld [vmem:[#allocation11 + $0x8] sm:$0xff]
    %v714 = vunpack.c.l.b16 %v710
    %v715 = vunpack.c.h.b16 %v710
    %v716 = vunpack.c.l.b16 %v711
    %v717 = vunpack.c.h.b16 %v711
    %v718 = vpack.c.b16 %v714, %v714
    %v719 = vpack.c.b16 %v715, %v715
    %v720 = vpack.c.b16 %v716, %v716
    %v721 = vpack.c.b16 %v717, %v717
    %vm722 = vcmask 64512
    %v724 = vsel %vm722, %v131, 0
    %vm726 = vcmask 1043456
    %v728 = vsel %vm726, %v718, 0
    %v731 = vsel %vm726, %v719, 0
    %v734 = vsel %vm726, %v720, 0
    %v737 = vsel %vm726, %v721, 0
    %739 = vmatprep.subr.bf16.mxu0 0
    %740 = vmatpush1.bf16.msra.mxu0 0
    %741 = vmatprep.subr.bf16.mxu0 0
    %742 = vmatpush1.bf16.msra.mxu0 0
    %743 = vmatprep.subr.bf16.mxu0 0
    %744 = vmatpush1.bf16.msra.mxu0 0
    %745 = vmatprep.subr.bf16.mxu0 0
    %746 = vmatpush1.bf16.msra.mxu0 0
    %747 = vmatprep.subr.bf16.mxu0 0
    %748 = vmatpush1.bf16.msra.mxu0 0
    %749 = vmatprep.subr.bf16.mxu0 0
    %750 = vmatpush1.bf16.msra.mxu0 0
    %751 = vmatprep.subr.bf16.mxu0 0
    %752 = vmatpush1.bf16.msra.mxu0 0
    %753 = vmatprep.subr.bf16.mxu0 %v731
    %754 = vmatpush1.bf16.msra.mxu0 %v728
    %755 = vmatprep.subr.bf16.mxu0 0
    %756 = vmatpush2.bf16.msra.mxu0 0
    %757 = vmatprep.subr.bf16.mxu0 0
    %758 = vmatpush2.bf16.msra.mxu0 0
    %759 = vmatprep.subr.bf16.mxu0 0
    %760 = vmatpush2.bf16.msra.mxu0 0
    %761 = vmatprep.subr.bf16.mxu0 0
    %762 = vmatpush2.bf16.msra.mxu0 0
    %763 = vmatprep.subr.bf16.mxu0 0
    %764 = vmatpush2.bf16.msra.mxu0 0
    %765 = vmatprep.subr.bf16.mxu0 0
    %766 = vmatpush2.bf16.msra.mxu0 0
    %767 = vmatprep.subr.bf16.mxu0 0
    %768 = vmatpush2.bf16.msra.mxu0 0
    %769 = vmatprep.subr.bf16.mxu0 0
    %770 = vmatpush2.bf16.msra.mxu0 0
    %771 = vmatprep.mubr.bf16.mxu0 0
    %772 = vmatmul.mubr.bf16.gmra.mxu0 %v724
    %v773 = vpop.f32.mrf.mxu0
    %v774 = vadd.f32 0.0, %v773
    %v775 = vpop.f32.mrf.mxu0
    %v776 = vadd.f32 0.0, %v775
    %v777 = vpop.f32.mrf.mxu0
    %v778 = vpop.f32.mrf.mxu0
    %779 = vdwg.mxu0
    %780 = vmatprep.subr.bf16.mxu0 0
    %781 = vmatpush1.bf16.msra.mxu0 0
    %782 = vmatprep.subr.bf16.mxu0 0
    %783 = vmatpush1.bf16.msra.mxu0 0
    %784 = vmatprep.subr.bf16.mxu0 0
    %785 = vmatpush1.bf16.msra.mxu0 0
    %786 = vmatprep.subr.bf16.mxu0 0
    %787 = vmatpush1.bf16.msra.mxu0 0
    %788 = vmatprep.subr.bf16.mxu0 0
    %789 = vmatpush1.bf16.msra.mxu0 0
    %790 = vmatprep.subr.bf16.mxu0 0
    %791 = vmatpush1.bf16.msra.mxu0 0
    %792 = vmatprep.subr.bf16.mxu0 0
    %793 = vmatpush1.bf16.msra.mxu0 0
    %794 = vmatprep.subr.bf16.mxu0 %v737
    %795 = vmatpush1.bf16.msra.mxu0 %v734
    %796 = vmatprep.subr.bf16.mxu0 0
    %797 = vmatpush2.bf16.msra.mxu0 0
    %798 = vmatprep.subr.bf16.mxu0 0
    %799 = vmatpush2.bf16.msra.mxu0 0
    %800 = vmatprep.subr.bf16.mxu0 0
    %801 = vmatpush2.bf16.msra.mxu0 0
    %802 = vmatprep.subr.bf16.mxu0 0
    %803 = vmatpush2.bf16.msra.mxu0 0
    %804 = vmatprep.subr.bf16.mxu0 0
    %805 = vmatpush2.bf16.msra.mxu0 0
    %806 = vmatprep.subr.bf16.mxu0 0
    %807 = vmatpush2.bf16.msra.mxu0 0
    %808 = vmatprep.subr.bf16.mxu0 0
    %809 = vmatpush2.bf16.msra.mxu0 0
    %810 = vmatprep.subr.bf16.mxu0 0
    %811 = vmatpush2.bf16.msra.mxu0 0
    %812 = vmatprep.mubr.bf16.mxu0 0
    %813 = vmatmul.mubr.bf16.gmra.mxu0 %v724
    %v814 = vpop.f32.mrf.mxu0
    %v815 = vadd.f32 0.0, %v814
    %v816 = vpop.f32.mrf.mxu0
    %v817 = vadd.f32 0.0, %v816
    %v818 = vpop.f32.mrf.mxu0
    %v819 = vpop.f32.mrf.mxu0
    %820 = vdwg.mxu0
    %v1077 = vunpack.c.l.b16 %v454
    %v1078 = vunpack.c.h.b16 %v454
    %v1079 = vunpack.c.l.b16 %v455
    %v1080 = vunpack.c.h.b16 %v455
    %v1081 = vunpack.c.l.b16 %v456
    %v1082 = vunpack.c.h.b16 %v456
    %v1083 = vunpack.c.l.b16 %v457
    %v1084 = vunpack.c.h.b16 %v457
    %v1085 = vunpack.c.l.b16 %v458
    %v1086 = vunpack.c.h.b16 %v458
    %v1087 = vunpack.c.l.b16 %v459
    %v1088 = vunpack.c.h.b16 %v459
    %v1089 = vunpack.c.l.b16 %v460
    %v1090 = vunpack.c.h.b16 %v460
    %v1091 = vunpack.c.l.b16 %v461
    %v1092 = vunpack.c.h.b16 %v461
    %v1093 = vunpack.c.l.b16 %v462
    %v1094 = vunpack.c.h.b16 %v462
    %v1095 = vunpack.c.l.b16 %v463
    %v1096 = vunpack.c.h.b16 %v463
    %v1097 = vunpack.c.l.b16 %v464
    %v1098 = vunpack.c.h.b16 %v464
    %v1099 = vunpack.c.l.b16 %v465
    %v1100 = vunpack.c.h.b16 %v465
    %v1101 = vunpack.c.l.b16 %v466
    %v1102 = vunpack.c.h.b16 %v466
    %v1103 = vunpack.c.l.b16 %v467
    %v1104 = vunpack.c.h.b16 %v467
    %v1105 = vunpack.c.l.b16 %v468
    %v1106 = vunpack.c.h.b16 %v468
    %v1107 = vunpack.c.l.b16 %v469
    %v1108 = vunpack.c.h.b16 %v469
    %v1109 = vunpack.c.l.b16 %v470
    %v1110 = vunpack.c.h.b16 %v470
    %v1111 = vunpack.c.l.b16 %v471
    %v1112 = vunpack.c.h.b16 %v471
    %v1113 = vunpack.c.l.b16 %v472
    %v1114 = vunpack.c.h.b16 %v472
    %v1115 = vunpack.c.l.b16 %v473
    %v1116 = vunpack.c.h.b16 %v473
    %v1117 = vunpack.c.l.b16 %v474
    %v1118 = vunpack.c.h.b16 %v474
    %v1119 = vunpack.c.l.b16 %v475
    %v1120 = vunpack.c.h.b16 %v475
    %v1121 = vunpack.c.l.b16 %v476
    %v1122 = vunpack.c.h.b16 %v476
    %v1123 = vunpack.c.l.b16 %v477
    %v1124 = vunpack.c.h.b16 %v477
    %v1125 = vunpack.c.l.b16 %v478
    %v1126 = vunpack.c.h.b16 %v478
    %v1127 = vunpack.c.l.b16 %v479
    %v1128 = vunpack.c.h.b16 %v479
    %v1129 = vunpack.c.l.b16 %v480
    %v1130 = vunpack.c.h.b16 %v480
    %v1131 = vunpack.c.l.b16 %v481
    %v1132 = vunpack.c.h.b16 %v481
    %v1133 = vunpack.c.l.b16 %v482
    %v1134 = vunpack.c.h.b16 %v482
    %v1135 = vunpack.c.l.b16 %v483
    %v1136 = vunpack.c.h.b16 %v483
    %v1137 = vunpack.c.l.b16 %v484
    %v1138 = vunpack.c.h.b16 %v484
    %v1139 = vunpack.c.l.b16 %v485
    %v1140 = vunpack.c.h.b16 %v485
    %v1141 = vunpack.c.l.b16 %v486
    %v1142 = vunpack.c.h.b16 %v486
    %v1143 = vunpack.c.l.b16 %v487
    %v1144 = vunpack.c.h.b16 %v487
    %v1145 = vunpack.c.l.b16 %v488
    %v1146 = vunpack.c.h.b16 %v488
    %v1147 = vunpack.c.l.b16 %v489
    %v1148 = vunpack.c.h.b16 %v489
    %v1149 = vunpack.c.l.b16 %v490
    %v1150 = vunpack.c.h.b16 %v490
    %v1151 = vunpack.c.l.b16 %v491
    %v1152 = vunpack.c.h.b16 %v491
    %v1153 = vunpack.c.l.b16 %v492
    %v1154 = vunpack.c.h.b16 %v492
    %v1155 = vunpack.c.l.b16 %v493
    %v1156 = vunpack.c.h.b16 %v493
    %v1157 = vunpack.c.l.b16 %v494
    %v1158 = vunpack.c.h.b16 %v494
    %v1159 = vunpack.c.l.b16 %v495
    %v1160 = vunpack.c.h.b16 %v495
    %v1161 = vunpack.c.l.b16 %v496
    %v1162 = vunpack.c.h.b16 %v496
    %v1163 = vunpack.c.l.b16 %v497
    %v1164 = vunpack.c.h.b16 %v497
    %v1165 = vunpack.c.l.b16 %v498
    %v1166 = vunpack.c.h.b16 %v498
    %v1167 = vunpack.c.l.b16 %v499
    %v1168 = vunpack.c.h.b16 %v499
    %v1169 = vunpack.c.l.b16 %v500
    %v1170 = vunpack.c.h.b16 %v500
    %v1171 = vunpack.c.l.b16 %v501
    %v1172 = vunpack.c.h.b16 %v501
    %v1173 = vunpack.c.l.b16 %v502
    %v1174 = vunpack.c.h.b16 %v502
    %v1175 = vunpack.c.l.b16 %v503
    %v1176 = vunpack.c.h.b16 %v503
    %v1177 = vunpack.c.l.b16 %v504
    %v1178 = vunpack.c.h.b16 %v504
    %v1179 = vunpack.c.l.b16 %v505
    %v1180 = vunpack.c.h.b16 %v505
    %v1181 = vunpack.c.l.b16 %v506
    %v1182 = vunpack.c.h.b16 %v506
    %v1183 = vunpack.c.l.b16 %v507
    %v1184 = vunpack.c.h.b16 %v507
    %v1185 = vunpack.c.l.b16 %v508
    %v1186 = vunpack.c.h.b16 %v508
    %v1187 = vunpack.c.l.b16 %v509
    %v1188 = vunpack.c.h.b16 %v509
    %v1189 = vunpack.c.l.b16 %v510
    %v1190 = vunpack.c.h.b16 %v510
    %v1191 = vunpack.c.l.b16 %v511
    %v1192 = vunpack.c.h.b16 %v511
    %v1193 = vunpack.c.l.b16 %v512
    %v1194 = vunpack.c.h.b16 %v512
    %v1195 = vunpack.c.l.b16 %v513
    %v1196 = vunpack.c.h.b16 %v513
    %v1197 = vunpack.c.l.b16 %v514
    %v1198 = vunpack.c.h.b16 %v514
    %v1199 = vunpack.c.l.b16 %v515
    %v1200 = vunpack.c.h.b16 %v515
    %v1201 = vunpack.c.l.b16 %v516
    %v1202 = vunpack.c.h.b16 %v516
    %v1203 = vunpack.c.l.b16 %v517
    %v1204 = vunpack.c.h.b16 %v517
    %v1205 = vunpack.c.l.b16 %v518
    %v1206 = vunpack.c.h.b16 %v518
    %v1207 = vunpack.c.l.b16 %v519
    %v1208 = vunpack.c.h.b16 %v519
    %v1209 = vunpack.c.l.b16 %v520
    %v1210 = vunpack.c.h.b16 %v520
    %v1211 = vunpack.c.l.b16 %v521
    %v1212 = vunpack.c.h.b16 %v521
    %v1213 = vunpack.c.l.b16 %v522
    %v1214 = vunpack.c.h.b16 %v522
    %v1215 = vunpack.c.l.b16 %v523
    %v1216 = vunpack.c.h.b16 %v523
    %v1217 = vunpack.c.l.b16 %v524
    %v1218 = vunpack.c.h.b16 %v524
    %v1219 = vunpack.c.l.b16 %v525
    %v1220 = vunpack.c.h.b16 %v525
    %v1221 = vunpack.c.l.b16 %v526
    %v1222 = vunpack.c.h.b16 %v526
    %v1223 = vunpack.c.l.b16 %v527
    %v1224 = vunpack.c.h.b16 %v527
    %v1225 = vunpack.c.l.b16 %v528
    %v1226 = vunpack.c.h.b16 %v528
    %v1227 = vunpack.c.l.b16 %v529
    %v1228 = vunpack.c.h.b16 %v529
    %v1229 = vunpack.c.l.b16 %v530
    %v1230 = vunpack.c.h.b16 %v530
    %v1231 = vunpack.c.l.b16 %v531
    %v1232 = vunpack.c.h.b16 %v531
    %v1233 = vunpack.c.l.b16 %v532
    %v1234 = vunpack.c.h.b16 %v532
    %v1235 = vunpack.c.l.b16 %v533
    %v1236 = vunpack.c.h.b16 %v533
    %v1237 = vunpack.c.l.b16 %v534
    %v1238 = vunpack.c.h.b16 %v534
    %v1239 = vunpack.c.l.b16 %v535
    %v1240 = vunpack.c.h.b16 %v535
    %v1241 = vunpack.c.l.b16 %v536
    %v1242 = vunpack.c.h.b16 %v536
    %v1243 = vunpack.c.l.b16 %v537
    %v1244 = vunpack.c.h.b16 %v537
    %v1245 = vunpack.c.l.b16 %v538
    %v1246 = vunpack.c.h.b16 %v538
    %v1247 = vunpack.c.l.b16 %v539
    %v1248 = vunpack.c.h.b16 %v539
    %v1249 = vunpack.c.l.b16 %v540
    %v1250 = vunpack.c.h.b16 %v540
    %v1251 = vunpack.c.l.b16 %v541
    %v1252 = vunpack.c.h.b16 %v541
    %v1253 = vunpack.c.l.b16 %v542
    %v1254 = vunpack.c.h.b16 %v542
    %v1255 = vunpack.c.l.b16 %v543
    %v1256 = vunpack.c.h.b16 %v543
    %v1257 = vunpack.c.l.b16 %v544
    %v1258 = vunpack.c.h.b16 %v544
    %v1259 = vunpack.c.l.b16 %v545
    %v1260 = vunpack.c.h.b16 %v545
    %v1261 = vunpack.c.l.b16 %v546
    %v1262 = vunpack.c.h.b16 %v546
    %v1263 = vunpack.c.l.b16 %v547
    %v1264 = vunpack.c.h.b16 %v547
    %v1265 = vunpack.c.l.b16 %v548
    %v1266 = vunpack.c.h.b16 %v548
    %v1267 = vunpack.c.l.b16 %v549
    %v1268 = vunpack.c.h.b16 %v549
    %v1269 = vunpack.c.l.b16 %v550
    %v1270 = vunpack.c.h.b16 %v550
    %v1271 = vunpack.c.l.b16 %v551
    %v1272 = vunpack.c.h.b16 %v551
    %v1273 = vunpack.c.l.b16 %v552
    %v1274 = vunpack.c.h.b16 %v552
    %v1275 = vunpack.c.l.b16 %v553
    %v1276 = vunpack.c.h.b16 %v553
    %v1277 = vunpack.c.l.b16 %v554
    %v1278 = vunpack.c.h.b16 %v554
    %v1279 = vunpack.c.l.b16 %v555
    %v1280 = vunpack.c.h.b16 %v555
    %v1281 = vunpack.c.l.b16 %v556
    %v1282 = vunpack.c.h.b16 %v556
    %v1283 = vunpack.c.l.b16 %v557
    %v1284 = vunpack.c.h.b16 %v557
    %v1285 = vunpack.c.l.b16 %v558
    %v1286 = vunpack.c.h.b16 %v558
    %v1287 = vunpack.c.l.b16 %v559
    %v1288 = vunpack.c.h.b16 %v559
    %v1289 = vunpack.c.l.b16 %v560
    %v1290 = vunpack.c.h.b16 %v560
    %v1291 = vunpack.c.l.b16 %v561
    %v1292 = vunpack.c.h.b16 %v561
    %v1293 = vunpack.c.l.b16 %v562
    %v1294 = vunpack.c.h.b16 %v562
    %v1295 = vunpack.c.l.b16 %v563
    %v1296 = vunpack.c.h.b16 %v563
    %v1297 = vunpack.c.l.b16 %v564
    %v1298 = vunpack.c.h.b16 %v564
    %v1299 = vunpack.c.l.b16 %v565
    %v1300 = vunpack.c.h.b16 %v565
    %v1301 = vunpack.c.l.b16 %v566
    %v1302 = vunpack.c.h.b16 %v566
    %v1303 = vunpack.c.l.b16 %v567
    %v1304 = vunpack.c.h.b16 %v567
    %v1305 = vunpack.c.l.b16 %v568
    %v1306 = vunpack.c.h.b16 %v568
    %v1307 = vunpack.c.l.b16 %v569
    %v1308 = vunpack.c.h.b16 %v569
    %v1309 = vunpack.c.l.b16 %v570
    %v1310 = vunpack.c.h.b16 %v570
    %v1311 = vunpack.c.l.b16 %v571
    %v1312 = vunpack.c.h.b16 %v571
    %v1313 = vunpack.c.l.b16 %v572
    %v1314 = vunpack.c.h.b16 %v572
    %v1315 = vunpack.c.l.b16 %v573
    %v1316 = vunpack.c.h.b16 %v573
    %v1317 = vunpack.c.l.b16 %v574
    %v1318 = vunpack.c.h.b16 %v574
    %v1319 = vunpack.c.l.b16 %v575
    %v1320 = vunpack.c.h.b16 %v575
    %v1321 = vunpack.c.l.b16 %v576
    %v1322 = vunpack.c.h.b16 %v576
    %v1323 = vunpack.c.l.b16 %v577
    %v1324 = vunpack.c.h.b16 %v577
    %v1325 = vunpack.c.l.b16 %v578
    %v1326 = vunpack.c.h.b16 %v578
    %v1327 = vunpack.c.l.b16 %v579
    %v1328 = vunpack.c.h.b16 %v579
    %v1329 = vunpack.c.l.b16 %v580
    %v1330 = vunpack.c.h.b16 %v580
    %v1331 = vunpack.c.l.b16 %v581
    %v1332 = vunpack.c.h.b16 %v581
    %v1333 = vunpack.c.l.b16 %v582
    %v1334 = vunpack.c.h.b16 %v582
    %v1335 = vunpack.c.l.b16 %v583
    %v1336 = vunpack.c.h.b16 %v583
    %v1337 = vunpack.c.l.b16 %v584
    %v1338 = vunpack.c.h.b16 %v584
    %v1339 = vunpack.c.l.b16 %v585
    %v1340 = vunpack.c.h.b16 %v585
    %v1341 = vunpack.c.l.b16 %v586
    %v1342 = vunpack.c.h.b16 %v586
    %v1343 = vunpack.c.l.b16 %v587
    %v1344 = vunpack.c.h.b16 %v587
    %v1345 = vunpack.c.l.b16 %v588
    %v1346 = vunpack.c.h.b16 %v588
    %v1347 = vunpack.c.l.b16 %v589
    %v1348 = vunpack.c.h.b16 %v589
    %v1349 = vunpack.c.l.b16 %v590
    %v1350 = vunpack.c.h.b16 %v590
    %v1351 = vunpack.c.l.b16 %v591
    %v1352 = vunpack.c.h.b16 %v591
    %v1353 = vunpack.c.l.b16 %v592
    %v1354 = vunpack.c.h.b16 %v592
    %v1355 = vunpack.c.l.b16 %v593
    %v1356 = vunpack.c.h.b16 %v593
    %v1357 = vunpack.c.l.b16 %v594
    %v1358 = vunpack.c.h.b16 %v594
    %v1359 = vunpack.c.l.b16 %v595
    %v1360 = vunpack.c.h.b16 %v595
    %v1361 = vunpack.c.l.b16 %v596
    %v1362 = vunpack.c.h.b16 %v596
    %v1363 = vunpack.c.l.b16 %v597
    %v1364 = vunpack.c.h.b16 %v597
    %v1365 = vunpack.c.l.b16 %v598
    %v1366 = vunpack.c.h.b16 %v598
    %v1367 = vunpack.c.l.b16 %v599
    %v1368 = vunpack.c.h.b16 %v599
    %v1369 = vunpack.c.l.b16 %v600
    %v1370 = vunpack.c.h.b16 %v600
    %v1371 = vunpack.c.l.b16 %v601
    %v1372 = vunpack.c.h.b16 %v601
    %v1373 = vunpack.c.l.b16 %v602
    %v1374 = vunpack.c.h.b16 %v602
    %v1375 = vunpack.c.l.b16 %v603
    %v1376 = vunpack.c.h.b16 %v603
    %v1377 = vunpack.c.l.b16 %v604
    %v1378 = vunpack.c.h.b16 %v604
    %v1379 = vunpack.c.l.b16 %v605
    %v1380 = vunpack.c.h.b16 %v605
    %v1381 = vunpack.c.l.b16 %v606
    %v1382 = vunpack.c.h.b16 %v606
    %v1383 = vunpack.c.l.b16 %v607
    %v1384 = vunpack.c.h.b16 %v607
    %v1385 = vunpack.c.l.b16 %v608
    %v1386 = vunpack.c.h.b16 %v608
    %v1387 = vunpack.c.l.b16 %v609
    %v1388 = vunpack.c.h.b16 %v609
    %v1389 = vunpack.c.l.b16 %v610
    %v1390 = vunpack.c.h.b16 %v610
    %v1391 = vunpack.c.l.b16 %v611
    %v1392 = vunpack.c.h.b16 %v611
    %v1393 = vunpack.c.l.b16 %v612
    %v1394 = vunpack.c.h.b16 %v612
    %v1395 = vunpack.c.l.b16 %v613
    %v1396 = vunpack.c.h.b16 %v613
    %v1397 = vunpack.c.l.b16 %v614
    %v1398 = vunpack.c.h.b16 %v614
    %v1399 = vunpack.c.l.b16 %v615
    %v1400 = vunpack.c.h.b16 %v615
    %v1401 = vunpack.c.l.b16 %v616
    %v1402 = vunpack.c.h.b16 %v616
    %v1403 = vunpack.c.l.b16 %v617
    %v1404 = vunpack.c.h.b16 %v617
    %v1405 = vunpack.c.l.b16 %v618
    %v1406 = vunpack.c.h.b16 %v618
    %v1407 = vunpack.c.l.b16 %v619
    %v1408 = vunpack.c.h.b16 %v619
    %v1409 = vunpack.c.l.b16 %v620
    %v1410 = vunpack.c.h.b16 %v620
    %v1411 = vunpack.c.l.b16 %v621
    %v1412 = vunpack.c.h.b16 %v621
    %v1413 = vunpack.c.l.b16 %v622
    %v1414 = vunpack.c.h.b16 %v622
    %v1415 = vunpack.c.l.b16 %v623
    %v1416 = vunpack.c.h.b16 %v623
    %v1417 = vunpack.c.l.b16 %v624
    %v1418 = vunpack.c.h.b16 %v624
    %v1419 = vunpack.c.l.b16 %v625
    %v1420 = vunpack.c.h.b16 %v625
    %v1421 = vunpack.c.l.b16 %v626
    %v1422 = vunpack.c.h.b16 %v626
    %v1423 = vunpack.c.l.b16 %v627
    %v1424 = vunpack.c.h.b16 %v627
    %v1425 = vunpack.c.l.b16 %v628
    %v1426 = vunpack.c.h.b16 %v628
    %v1427 = vunpack.c.l.b16 %v629
    %v1428 = vunpack.c.h.b16 %v629
    %v1429 = vunpack.c.l.b16 %v630
    %v1430 = vunpack.c.h.b16 %v630
    %v1431 = vunpack.c.l.b16 %v631
    %v1432 = vunpack.c.h.b16 %v631
    %v1433 = vunpack.c.l.b16 %v632
    %v1434 = vunpack.c.h.b16 %v632
    %v1435 = vunpack.c.l.b16 %v633
    %v1436 = vunpack.c.h.b16 %v633
    %v1437 = vunpack.c.l.b16 %v634
    %v1438 = vunpack.c.h.b16 %v634
    %v1439 = vunpack.c.l.b16 %v635
    %v1440 = vunpack.c.h.b16 %v635
    %v1441 = vunpack.c.l.b16 %v636
    %v1442 = vunpack.c.h.b16 %v636
    %v1443 = vunpack.c.l.b16 %v637
    %v1444 = vunpack.c.h.b16 %v637
    %v1445 = vunpack.c.l.b16 %v638
    %v1446 = vunpack.c.h.b16 %v638
    %v1447 = vunpack.c.l.b16 %v639
    %v1448 = vunpack.c.h.b16 %v639
    %v1449 = vunpack.c.l.b16 %v640
    %v1450 = vunpack.c.h.b16 %v640
    %v1451 = vunpack.c.l.b16 %v641
    %v1452 = vunpack.c.h.b16 %v641
    %v1453 = vunpack.c.l.b16 %v642
    %v1454 = vunpack.c.h.b16 %v642
    %v1455 = vunpack.c.l.b16 %v643
    %v1456 = vunpack.c.h.b16 %v643
    %v1457 = vunpack.c.l.b16 %v644
    %v1458 = vunpack.c.h.b16 %v644
    %v1459 = vunpack.c.l.b16 %v645
    %v1460 = vunpack.c.h.b16 %v645
    %v1461 = vunpack.c.l.b16 %v646
    %v1462 = vunpack.c.h.b16 %v646
    %v1463 = vunpack.c.l.b16 %v647
    %v1464 = vunpack.c.h.b16 %v647
    %v1465 = vunpack.c.l.b16 %v648
    %v1466 = vunpack.c.h.b16 %v648
    %v1467 = vunpack.c.l.b16 %v649
    %v1468 = vunpack.c.h.b16 %v649
    %v1469 = vunpack.c.l.b16 %v650
    %v1470 = vunpack.c.h.b16 %v650
    %v1471 = vunpack.c.l.b16 %v651
    %v1472 = vunpack.c.h.b16 %v651
    %v1473 = vunpack.c.l.b16 %v652
    %v1474 = vunpack.c.h.b16 %v652
    %v1475 = vunpack.c.l.b16 %v653
    %v1476 = vunpack.c.h.b16 %v653
    %v1477 = vunpack.c.l.b16 %v654
    %v1478 = vunpack.c.h.b16 %v654
    %v1479 = vunpack.c.l.b16 %v655
    %v1480 = vunpack.c.h.b16 %v655
    %v1481 = vunpack.c.l.b16 %v656
    %v1482 = vunpack.c.h.b16 %v656
    %v1483 = vunpack.c.l.b16 %v657
    %v1484 = vunpack.c.h.b16 %v657
    %v1485 = vunpack.c.l.b16 %v658
    %v1486 = vunpack.c.h.b16 %v658
    %v1487 = vunpack.c.l.b16 %v659
    %v1488 = vunpack.c.h.b16 %v659
    %v1489 = vunpack.c.l.b16 %v660
    %v1490 = vunpack.c.h.b16 %v660
    %v1491 = vunpack.c.l.b16 %v661
    %v1492 = vunpack.c.h.b16 %v661
    %v1493 = vunpack.c.l.b16 %v662
    %v1494 = vunpack.c.h.b16 %v662
    %v1495 = vunpack.c.l.b16 %v663
    %v1496 = vunpack.c.h.b16 %v663
    %v1497 = vunpack.c.l.b16 %v664
    %v1498 = vunpack.c.h.b16 %v664
    %v1499 = vunpack.c.l.b16 %v665
    %v1500 = vunpack.c.h.b16 %v665
    %v1501 = vunpack.c.l.b16 %v666
    %v1502 = vunpack.c.h.b16 %v666
    %v1503 = vunpack.c.l.b16 %v667
    %v1504 = vunpack.c.h.b16 %v667
    %v1505 = vunpack.c.l.b16 %v668
    %v1506 = vunpack.c.h.b16 %v668
    %v1507 = vunpack.c.l.b16 %v669
    %v1508 = vunpack.c.h.b16 %v669
    %v1509 = vunpack.c.l.b16 %v670
    %v1510 = vunpack.c.h.b16 %v670
    %v1511 = vunpack.c.l.b16 %v671
    %v1512 = vunpack.c.h.b16 %v671
    %v1513 = vunpack.c.l.b16 %v672
    %v1514 = vunpack.c.h.b16 %v672
    %v1515 = vunpack.c.l.b16 %v673
    %v1516 = vunpack.c.h.b16 %v673
    %v1517 = vunpack.c.l.b16 %v674
    %v1518 = vunpack.c.h.b16 %v674
    %v1519 = vunpack.c.l.b16 %v675
    %v1520 = vunpack.c.h.b16 %v675
    %v1521 = vunpack.c.l.b16 %v676
    %v1522 = vunpack.c.h.b16 %v676
    %v1523 = vunpack.c.l.b16 %v677
    %v1524 = vunpack.c.h.b16 %v677
    %v1525 = vunpack.c.l.b16 %v678
    %v1526 = vunpack.c.h.b16 %v678
    %v1527 = vunpack.c.l.b16 %v679
    %v1528 = vunpack.c.h.b16 %v679
    %v1529 = vunpack.c.l.b16 %v680
    %v1530 = vunpack.c.h.b16 %v680
    %v1531 = vunpack.c.l.b16 %v681
    %v1532 = vunpack.c.h.b16 %v681
    %v1533 = vunpack.c.l.b16 %v682
    %v1534 = vunpack.c.h.b16 %v682
    %v1535 = vunpack.c.l.b16 %v683
    %v1536 = vunpack.c.h.b16 %v683
    %v1537 = vunpack.c.l.b16 %v684
    %v1538 = vunpack.c.h.b16 %v684
    %v1539 = vunpack.c.l.b16 %v685
    %v1540 = vunpack.c.h.b16 %v685
    %v1541 = vunpack.c.l.b16 %v686
    %v1542 = vunpack.c.h.b16 %v686
    %v1543 = vunpack.c.l.b16 %v687
    %v1544 = vunpack.c.h.b16 %v687
    %v1545 = vunpack.c.l.b16 %v688
    %v1546 = vunpack.c.h.b16 %v688
    %v1547 = vunpack.c.l.b16 %v689
    %v1548 = vunpack.c.h.b16 %v689
    %v1549 = vunpack.c.l.b16 %v690
    %v1550 = vunpack.c.h.b16 %v690
    %v1551 = vunpack.c.l.b16 %v691
    %v1552 = vunpack.c.h.b16 %v691
    %v1553 = vunpack.c.l.b16 %v692
    %v1554 = vunpack.c.h.b16 %v692
    %v1555 = vunpack.c.l.b16 %v693
    %v1556 = vunpack.c.h.b16 %v693
    %v1557 = vunpack.c.l.b16 %v694
    %v1558 = vunpack.c.h.b16 %v694
    %v1559 = vunpack.c.l.b16 %v695
    %v1560 = vunpack.c.h.b16 %v695
    %v1561 = vunpack.c.l.b16 %v696
    %v1562 = vunpack.c.h.b16 %v696
    %v1563 = vunpack.c.l.b16 %v697
    %v1564 = vunpack.c.h.b16 %v697
    %v1565 = vunpack.c.l.b16 %v698
    %v1566 = vunpack.c.h.b16 %v698
    %v1567 = vunpack.c.l.b16 %v699
    %v1568 = vunpack.c.h.b16 %v699
    %v1569 = vunpack.c.l.b16 %v700
    %v1570 = vunpack.c.h.b16 %v700
    %v1571 = vunpack.c.l.b16 %v701
    %v1572 = vunpack.c.h.b16 %v701
    %v1573 = vunpack.c.l.b16 %v702
    %v1574 = vunpack.c.h.b16 %v702
    %v1575 = vunpack.c.l.b16 %v703
    %v1576 = vunpack.c.h.b16 %v703
    %v1577 = vunpack.c.l.b16 %v704
    %v1578 = vunpack.c.h.b16 %v704
    %v1579 = vunpack.c.l.b16 %v705
    %v1580 = vunpack.c.h.b16 %v705
    %v1581 = vunpack.c.l.b16 %v706
    %v1582 = vunpack.c.h.b16 %v706
    %v1583 = vunpack.c.l.b16 %v707
    %v1584 = vunpack.c.h.b16 %v707
    %v1585 = vunpack.c.l.b16 %v708
    %v1586 = vunpack.c.h.b16 %v708
    %v1587 = vunpack.c.l.b16 %v709
    %v1588 = vunpack.c.h.b16 %v709
    %v1589 = vpack.c.b16 %v1081, %v1077
    %v1590 = vpack.c.b16 %v1082, %v1078
    %v1591 = vpack.c.b16 %v1083, %v1079
    %v1592 = vpack.c.b16 %v1084, %v1080
    %v1593 = vpack.c.b16 %v1089, %v1085
    %v1594 = vpack.c.b16 %v1090, %v1086
    %v1595 = vpack.c.b16 %v1091, %v1087
    %v1596 = vpack.c.b16 %v1092, %v1088
    %v1597 = vpack.c.b16 %v1097, %v1093
    %v1598 = vpack.c.b16 %v1098, %v1094
    %v1599 = vpack.c.b16 %v1099, %v1095
    %v1600 = vpack.c.b16 %v1100, %v1096
    %v1601 = vpack.c.b16 %v1105, %v1101
    %v1602 = vpack.c.b16 %v1106, %v1102
    %v1603 = vpack.c.b16 %v1107, %v1103
    %v1604 = vpack.c.b16 %v1108, %v1104
    %v1605 = vpack.c.b16 %v1113, %v1109
    %v1606 = vpack.c.b16 %v1114, %v1110
    %v1607 = vpack.c.b16 %v1115, %v1111
    %v1608 = vpack.c.b16 %v1116, %v1112
    %v1609 = vpack.c.b16 %v1121, %v1117
    %v1610 = vpack.c.b16 %v1122, %v1118
    %v1611 = vpack.c.b16 %v1123, %v1119
    %v1612 = vpack.c.b16 %v1124, %v1120
    %v1613 = vpack.c.b16 %v1129, %v1125
    %v1614 = vpack.c.b16 %v1130, %v1126
    %v1615 = vpack.c.b16 %v1131, %v1127
    %v1616 = vpack.c.b16 %v1132, %v1128
    %v1617 = vpack.c.b16 %v1137, %v1133
    %v1618 = vpack.c.b16 %v1138, %v1134
    %v1619 = vpack.c.b16 %v1139, %v1135
    %v1620 = vpack.c.b16 %v1140, %v1136
    %v1621 = vpack.c.b16 %v1145, %v1141
    %v1622 = vpack.c.b16 %v1146, %v1142
    %v1623 = vpack.c.b16 %v1147, %v1143
    %v1624 = vpack.c.b16 %v1148, %v1144
    %v1625 = vpack.c.b16 %v1153, %v1149
    %v1626 = vpack.c.b16 %v1154, %v1150
    %v1627 = vpack.c.b16 %v1155, %v1151
    %v1628 = vpack.c.b16 %v1156, %v1152
    %v1629 = vpack.c.b16 %v1161, %v1157
    %v1630 = vpack.c.b16 %v1162, %v1158
    %v1631 = vpack.c.b16 %v1163, %v1159
    %v1632 = vpack.c.b16 %v1164, %v1160
    %v1633 = vpack.c.b16 %v1169, %v1165
    %v1634 = vpack.c.b16 %v1170, %v1166
    %v1635 = vpack.c.b16 %v1171, %v1167
    %v1636 = vpack.c.b16 %v1172, %v1168
    %v1637 = vpack.c.b16 %v1177, %v1173
    %v1638 = vpack.c.b16 %v1178, %v1174
    %v1639 = vpack.c.b16 %v1179, %v1175
    %v1640 = vpack.c.b16 %v1180, %v1176
    %v1641 = vpack.c.b16 %v1185, %v1181
    %v1642 = vpack.c.b16 %v1186, %v1182
    %v1643 = vpack.c.b16 %v1187, %v1183
    %v1644 = vpack.c.b16 %v1188, %v1184
    %v1645 = vpack.c.b16 %v1193, %v1189
    %v1646 = vpack.c.b16 %v1194, %v1190
    %v1647 = vpack.c.b16 %v1195, %v1191
    %v1648 = vpack.c.b16 %v1196, %v1192
    %v1649 = vpack.c.b16 %v1201, %v1197
    %v1650 = vpack.c.b16 %v1202, %v1198
    %v1651 = vpack.c.b16 %v1203, %v1199
    %v1652 = vpack.c.b16 %v1204, %v1200
    %v1653 = vpack.c.b16 %v1209, %v1205
    %v1654 = vpack.c.b16 %v1210, %v1206
    %v1655 = vpack.c.b16 %v1211, %v1207
    %v1656 = vpack.c.b16 %v1212, %v1208
    %v1657 = vpack.c.b16 %v1217, %v1213
    %v1658 = vpack.c.b16 %v1218, %v1214
    %v1659 = vpack.c.b16 %v1219, %v1215
    %v1660 = vpack.c.b16 %v1220, %v1216
    %v1661 = vpack.c.b16 %v1225, %v1221
    %v1662 = vpack.c.b16 %v1226, %v1222
    %v1663 = vpack.c.b16 %v1227, %v1223
    %v1664 = vpack.c.b16 %v1228, %v1224
    %v1665 = vpack.c.b16 %v1233, %v1229
    %v1666 = vpack.c.b16 %v1234, %v1230
    %v1667 = vpack.c.b16 %v1235, %v1231
    %v1668 = vpack.c.b16 %v1236, %v1232
    %v1669 = vpack.c.b16 %v1241, %v1237
    %v1670 = vpack.c.b16 %v1242, %v1238
    %v1671 = vpack.c.b16 %v1243, %v1239
    %v1672 = vpack.c.b16 %v1244, %v1240
    %v1673 = vpack.c.b16 %v1249, %v1245
    %v1674 = vpack.c.b16 %v1250, %v1246
    %v1675 = vpack.c.b16 %v1251, %v1247
    %v1676 = vpack.c.b16 %v1252, %v1248
    %v1677 = vpack.c.b16 %v1257, %v1253
    %v1678 = vpack.c.b16 %v1258, %v1254
    %v1679 = vpack.c.b16 %v1259, %v1255
    %v1680 = vpack.c.b16 %v1260, %v1256
    %v1681 = vpack.c.b16 %v1265, %v1261
    %v1682 = vpack.c.b16 %v1266, %v1262
    %v1683 = vpack.c.b16 %v1267, %v1263
    %v1684 = vpack.c.b16 %v1268, %v1264
    %v1685 = vpack.c.b16 %v1273, %v1269
    %v1686 = vpack.c.b16 %v1274, %v1270
    %v1687 = vpack.c.b16 %v1275, %v1271
    %v1688 = vpack.c.b16 %v1276, %v1272
    %v1689 = vpack.c.b16 %v1281, %v1277
    %v1690 = vpack.c.b16 %v1282, %v1278
    %v1691 = vpack.c.b16 %v1283, %v1279
    %v1692 = vpack.c.b16 %v1284, %v1280
    %v1693 = vpack.c.b16 %v1289, %v1285
    %v1694 = vpack.c.b16 %v1290, %v1286
    %v1695 = vpack.c.b16 %v1291, %v1287
    %v1696 = vpack.c.b16 %v1292, %v1288
    %v1697 = vpack.c.b16 %v1297, %v1293
    %v1698 = vpack.c.b16 %v1298, %v1294
    %v1699 = vpack.c.b16 %v1299, %v1295
    %v1700 = vpack.c.b16 %v1300, %v1296
    %v1701 = vpack.c.b16 %v1305, %v1301
    %v1702 = vpack.c.b16 %v1306, %v1302
    %v1703 = vpack.c.b16 %v1307, %v1303
    %v1704 = vpack.c.b16 %v1308, %v1304
    %v1705 = vpack.c.b16 %v1313, %v1309
    %v1706 = vpack.c.b16 %v1314, %v1310
    %v1707 = vpack.c.b16 %v1315, %v1311
    %v1708 = vpack.c.b16 %v1316, %v1312
    %v1709 = vpack.c.b16 %v1321, %v1317
    %v1710 = vpack.c.b16 %v1322, %v1318
    %v1711 = vpack.c.b16 %v1323, %v1319
    %v1712 = vpack.c.b16 %v1324, %v1320
    %v1713 = vpack.c.b16 %v1329, %v1325
    %v1714 = vpack.c.b16 %v1330, %v1326
    %v1715 = vpack.c.b16 %v1331, %v1327
    %v1716 = vpack.c.b16 %v1332, %v1328
    %v1717 = vpack.c.b16 %v1337, %v1333
    %v1718 = vpack.c.b16 %v1338, %v1334
    %v1719 = vpack.c.b16 %v1339, %v1335
    %v1720 = vpack.c.b16 %v1340, %v1336
    %v1721 = vpack.c.b16 %v1345, %v1341
    %v1722 = vpack.c.b16 %v1346, %v1342
    %v1723 = vpack.c.b16 %v1347, %v1343
    %v1724 = vpack.c.b16 %v1348, %v1344
    %v1725 = vpack.c.b16 %v1353, %v1349
    %v1726 = vpack.c.b16 %v1354, %v1350
    %v1727 = vpack.c.b16 %v1355, %v1351
    %v1728 = vpack.c.b16 %v1356, %v1352
    %v1729 = vpack.c.b16 %v1361, %v1357
    %v1730 = vpack.c.b16 %v1362, %v1358
    %v1731 = vpack.c.b16 %v1363, %v1359
    %v1732 = vpack.c.b16 %v1364, %v1360
    %v1733 = vpack.c.b16 %v1369, %v1365
    %v1734 = vpack.c.b16 %v1370, %v1366
    %v1735 = vpack.c.b16 %v1371, %v1367
    %v1736 = vpack.c.b16 %v1372, %v1368
    %v1737 = vpack.c.b16 %v1377, %v1373
    %v1738 = vpack.c.b16 %v1378, %v1374
    %v1739 = vpack.c.b16 %v1379, %v1375
    %v1740 = vpack.c.b16 %v1380, %v1376
    %v1741 = vpack.c.b16 %v1385, %v1381
    %v1742 = vpack.c.b16 %v1386, %v1382
    %v1743 = vpack.c.b16 %v1387, %v1383
    %v1744 = vpack.c.b16 %v1388, %v1384
    %v1745 = vpack.c.b16 %v1393, %v1389
    %v1746 = vpack.c.b16 %v1394, %v1390
    %v1747 = vpack.c.b16 %v1395, %v1391
    %v1748 = vpack.c.b16 %v1396, %v1392
    %v1749 = vpack.c.b16 %v1401, %v1397
    %v1750 = vpack.c.b16 %v1402, %v1398
    %v1751 = vpack.c.b16 %v1403, %v1399
    %v1752 = vpack.c.b16 %v1404, %v1400
    %v1753 = vpack.c.b16 %v1409, %v1405
    %v1754 = vpack.c.b16 %v1410, %v1406
    %v1755 = vpack.c.b16 %v1411, %v1407
    %v1756 = vpack.c.b16 %v1412, %v1408
    %v1757 = vpack.c.b16 %v1417, %v1413
    %v1758 = vpack.c.b16 %v1418, %v1414
    %v1759 = vpack.c.b16 %v1419, %v1415
    %v1760 = vpack.c.b16 %v1420, %v1416
    %v1761 = vpack.c.b16 %v1425, %v1421
    %v1762 = vpack.c.b16 %v1426, %v1422
    %v1763 = vpack.c.b16 %v1427, %v1423
    %v1764 = vpack.c.b16 %v1428, %v1424
    %v1765 = vpack.c.b16 %v1433, %v1429
    %v1766 = vpack.c.b16 %v1434, %v1430
    %v1767 = vpack.c.b16 %v1435, %v1431
    %v1768 = vpack.c.b16 %v1436, %v1432
    %v1769 = vpack.c.b16 %v1441, %v1437
    %v1770 = vpack.c.b16 %v1442, %v1438
    %v1771 = vpack.c.b16 %v1443, %v1439
    %v1772 = vpack.c.b16 %v1444, %v1440
    %v1773 = vpack.c.b16 %v1449, %v1445
    %v1774 = vpack.c.b16 %v1450, %v1446
    %v1775 = vpack.c.b16 %v1451, %v1447
    %v1776 = vpack.c.b16 %v1452, %v1448
    %v1777 = vpack.c.b16 %v1457, %v1453
    %v1778 = vpack.c.b16 %v1458, %v1454
    %v1779 = vpack.c.b16 %v1459, %v1455
    %v1780 = vpack.c.b16 %v1460, %v1456
    %v1781 = vpack.c.b16 %v1465, %v1461
    %v1782 = vpack.c.b16 %v1466, %v1462
    %v1783 = vpack.c.b16 %v1467, %v1463
    %v1784 = vpack.c.b16 %v1468, %v1464
    %v1785 = vpack.c.b16 %v1473, %v1469
    %v1786 = vpack.c.b16 %v1474, %v1470
    %v1787 = vpack.c.b16 %v1475, %v1471
    %v1788 = vpack.c.b16 %v1476, %v1472
    %v1789 = vpack.c.b16 %v1481, %v1477
    %v1790 = vpack.c.b16 %v1482, %v1478
    %v1791 = vpack.c.b16 %v1483, %v1479
    %v1792 = vpack.c.b16 %v1484, %v1480
    %v1793 = vpack.c.b16 %v1489, %v1485
    %v1794 = vpack.c.b16 %v1490, %v1486
    %v1795 = vpack.c.b16 %v1491, %v1487
    %v1796 = vpack.c.b16 %v1492, %v1488
    %v1797 = vpack.c.b16 %v1497, %v1493
    %v1798 = vpack.c.b16 %v1498, %v1494
    %v1799 = vpack.c.b16 %v1499, %v1495
    %v1800 = vpack.c.b16 %v1500, %v1496
    %v1801 = vpack.c.b16 %v1505, %v1501
    %v1802 = vpack.c.b16 %v1506, %v1502
    %v1803 = vpack.c.b16 %v1507, %v1503
    %v1804 = vpack.c.b16 %v1508, %v1504
    %v1805 = vpack.c.b16 %v1513, %v1509
    %v1806 = vpack.c.b16 %v1514, %v1510
    %v1807 = vpack.c.b16 %v1515, %v1511
    %v1808 = vpack.c.b16 %v1516, %v1512
    %v1809 = vpack.c.b16 %v1521, %v1517
    %v1810 = vpack.c.b16 %v1522, %v1518
    %v1811 = vpack.c.b16 %v1523, %v1519
    %v1812 = vpack.c.b16 %v1524, %v1520
    %v1813 = vpack.c.b16 %v1529, %v1525
    %v1814 = vpack.c.b16 %v1530, %v1526
    %v1815 = vpack.c.b16 %v1531, %v1527
    %v1816 = vpack.c.b16 %v1532, %v1528
    %v1817 = vpack.c.b16 %v1537, %v1533
    %v1818 = vpack.c.b16 %v1538, %v1534
    %v1819 = vpack.c.b16 %v1539, %v1535
    %v1820 = vpack.c.b16 %v1540, %v1536
    %v1821 = vpack.c.b16 %v1545, %v1541
    %v1822 = vpack.c.b16 %v1546, %v1542
    %v1823 = vpack.c.b16 %v1547, %v1543
    %v1824 = vpack.c.b16 %v1548, %v1544
    %v1825 = vpack.c.b16 %v1553, %v1549
    %v1826 = vpack.c.b16 %v1554, %v1550
    %v1827 = vpack.c.b16 %v1555, %v1551
    %v1828 = vpack.c.b16 %v1556, %v1552
    %v1829 = vpack.c.b16 %v1561, %v1557
    %v1830 = vpack.c.b16 %v1562, %v1558
    %v1831 = vpack.c.b16 %v1563, %v1559
    %v1832 = vpack.c.b16 %v1564, %v1560
    %v1833 = vpack.c.b16 %v1569, %v1565
    %v1834 = vpack.c.b16 %v1570, %v1566
    %v1835 = vpack.c.b16 %v1571, %v1567
    %v1836 = vpack.c.b16 %v1572, %v1568
    %v1837 = vpack.c.b16 %v1577, %v1573
    %v1838 = vpack.c.b16 %v1578, %v1574
    %v1839 = vpack.c.b16 %v1579, %v1575
    %v1840 = vpack.c.b16 %v1580, %v1576
    %v1841 = vpack.c.b16 %v1585, %v1581
    %v1842 = vpack.c.b16 %v1586, %v1582
    %v1843 = vpack.c.b16 %v1587, %v1583
    %v1844 = vpack.c.b16 %v1588, %v1584
    %2101 = vmatprep.subr.bf16.mxu0 %v1618
    %2102 = vmatpush1.bf16.msra.mxu0 %v1617
    %2103 = vmatprep.subr.bf16.mxu0 %v1614
    %2104 = vmatpush1.bf16.msra.mxu0 %v1613
    %2105 = vmatprep.subr.bf16.mxu0 %v1610
    %2106 = vmatpush1.bf16.msra.mxu0 %v1609
    %2107 = vmatprep.subr.bf16.mxu0 %v1606
    %2108 = vmatpush1.bf16.msra.mxu0 %v1605
    %2109 = vmatprep.subr.bf16.mxu0 %v1602
    %2110 = vmatpush1.bf16.msra.mxu0 %v1601
    %2111 = vmatprep.subr.bf16.mxu0 %v1598
    %2112 = vmatpush1.bf16.msra.mxu0 %v1597
    %2113 = vmatprep.subr.bf16.mxu0 %v1594
    %2114 = vmatpush1.bf16.msra.mxu0 %v1593
    %2115 = vmatprep.subr.bf16.mxu0 %v1590
    %2116 = vmatpush1.bf16.msra.mxu0 %v1589
    %2117 = vmatprep.subr.bf16.mxu0 %v1650
    %2118 = vmatpush2.bf16.msra.mxu0 %v1649
    %2119 = vmatprep.subr.bf16.mxu0 %v1646
    %2120 = vmatpush2.bf16.msra.mxu0 %v1645
    %2121 = vmatprep.subr.bf16.mxu0 %v1642
    %2122 = vmatpush2.bf16.msra.mxu0 %v1641
    %2123 = vmatprep.subr.bf16.mxu0 %v1638
    %2124 = vmatpush2.bf16.msra.mxu0 %v1637
    %2125 = vmatprep.subr.bf16.mxu0 %v1634
    %2126 = vmatpush2.bf16.msra.mxu0 %v1633
    %2127 = vmatprep.subr.bf16.mxu0 %v1630
    %2128 = vmatpush2.bf16.msra.mxu0 %v1629
    %2129 = vmatprep.subr.bf16.mxu0 %v1626
    %2130 = vmatpush2.bf16.msra.mxu0 %v1625
    %2131 = vmatprep.subr.bf16.mxu0 %v1622
    %2132 = vmatpush2.bf16.msra.mxu0 %v1621
    %2133 = vmatprep.mubr.bf16.mxu0 %v447
    %2134 = vmatmul.mubr.bf16.gmra.mxu0 %v446
    %v2135 = vpop.f32.mrf.mxu0
    %v2136 = vadd.f32 %v774, %v2135
    %v2137 = vpop.f32.mrf.mxu0
    %v2138 = vadd.f32 %v776, %v2137
    %v2139 = vpop.f32.mrf.mxu0
    %v2140 = vpop.f32.mrf.mxu0
    %2141 = vdwg.mxu0
    %2142 = vmatprep.subr.bf16.mxu0 %v1682
    %2143 = vmatpush1.bf16.msra.mxu0 %v1681
    %2144 = vmatprep.subr.bf16.mxu0 %v1678
    %2145 = vmatpush1.bf16.msra.mxu0 %v1677
    %2146 = vmatprep.subr.bf16.mxu0 %v1674
    %2147 = vmatpush1.bf16.msra.mxu0 %v1673
    %2148 = vmatprep.subr.bf16.mxu0 %v1670
    %2149 = vmatpush1.bf16.msra.mxu0 %v1669
    %2150 = vmatprep.subr.bf16.mxu0 %v1666
    %2151 = vmatpush1.bf16.msra.mxu0 %v1665
    %2152 = vmatprep.subr.bf16.mxu0 %v1662
    %2153 = vmatpush1.bf16.msra.mxu0 %v1661
    %2154 = vmatprep.subr.bf16.mxu0 %v1658
    %2155 = vmatpush1.bf16.msra.mxu0 %v1657
    %2156 = vmatprep.subr.bf16.mxu0 %v1654
    %2157 = vmatpush1.bf16.msra.mxu0 %v1653
    %2158 = vmatprep.subr.bf16.mxu0 %v1714
    %2159 = vmatpush2.bf16.msra.mxu0 %v1713
    %2160 = vmatprep.subr.bf16.mxu0 %v1710
    %2161 = vmatpush2.bf16.msra.mxu0 %v1709
    %2162 = vmatprep.subr.bf16.mxu0 %v1706
    %2163 = vmatpush2.bf16.msra.mxu0 %v1705
    %2164 = vmatprep.subr.bf16.mxu0 %v1702
    %2165 = vmatpush2.bf16.msra.mxu0 %v1701
    %2166 = vmatprep.subr.bf16.mxu0 %v1698
    %2167 = vmatpush2.bf16.msra.mxu0 %v1697
    %2168 = vmatprep.subr.bf16.mxu0 %v1694
    %2169 = vmatpush2.bf16.msra.mxu0 %v1693
    %2170 = vmatprep.subr.bf16.mxu0 %v1690
    %2171 = vmatpush2.bf16.msra.mxu0 %v1689
    %2172 = vmatprep.subr.bf16.mxu0 %v1686
    %2173 = vmatpush2.bf16.msra.mxu0 %v1685
    %2174 = vmatprep.mubr.bf16.mxu0 %v449
    %2175 = vmatmul.mubr.bf16.gmra.mxu0 %v448
    %v2176 = vpop.f32.mrf.mxu0
    %v2177 = vadd.f32 %v2136, %v2176
    %v2178 = vpop.f32.mrf.mxu0
    %v2179 = vadd.f32 %v2138, %v2178
    %v2180 = vpop.f32.mrf.mxu0
    %v2181 = vpop.f32.mrf.mxu0
    %2182 = vdwg.mxu0
    %2183 = vmatprep.subr.bf16.mxu0 %v1746
    %2184 = vmatpush1.bf16.msra.mxu0 %v1745
    %2185 = vmatprep.subr.bf16.mxu0 %v1742
    %2186 = vmatpush1.bf16.msra.mxu0 %v1741
    %2187 = vmatprep.subr.bf16.mxu0 %v1738
    %2188 = vmatpush1.bf16.msra.mxu0 %v1737
    %2189 = vmatprep.subr.bf16.mxu0 %v1734
    %2190 = vmatpush1.bf16.msra.mxu0 %v1733
    %2191 = vmatprep.subr.bf16.mxu0 %v1730
    %2192 = vmatpush1.bf16.msra.mxu0 %v1729
    %2193 = vmatprep.subr.bf16.mxu0 %v1726
    %2194 = vmatpush1.bf16.msra.mxu0 %v1725
    %2195 = vmatprep.subr.bf16.mxu0 %v1722
    %2196 = vmatpush1.bf16.msra.mxu0 %v1721
    %2197 = vmatprep.subr.bf16.mxu0 %v1718
    %2198 = vmatpush1.bf16.msra.mxu0 %v1717
    %2199 = vmatprep.subr.bf16.mxu0 %v1778
    %2200 = vmatpush2.bf16.msra.mxu0 %v1777
    %2201 = vmatprep.subr.bf16.mxu0 %v1774
    %2202 = vmatpush2.bf16.msra.mxu0 %v1773
    %2203 = vmatprep.subr.bf16.mxu0 %v1770
    %2204 = vmatpush2.bf16.msra.mxu0 %v1769
    %2205 = vmatprep.subr.bf16.mxu0 %v1766
    %2206 = vmatpush2.bf16.msra.mxu0 %v1765
    %2207 = vmatprep.subr.bf16.mxu0 %v1762
    %2208 = vmatpush2.bf16.msra.mxu0 %v1761
    %2209 = vmatprep.subr.bf16.mxu0 %v1758
    %2210 = vmatpush2.bf16.msra.mxu0 %v1757
    %2211 = vmatprep.subr.bf16.mxu0 %v1754
    %2212 = vmatpush2.bf16.msra.mxu0 %v1753
    %2213 = vmatprep.subr.bf16.mxu0 %v1750
    %2214 = vmatpush2.bf16.msra.mxu0 %v1749
    %2215 = vmatprep.mubr.bf16.mxu0 %v451
    %2216 = vmatmul.mubr.bf16.gmra.mxu0 %v450
    %v2217 = vpop.f32.mrf.mxu0
    %v2218 = vadd.f32 %v2177, %v2217
    %v2219 = vpop.f32.mrf.mxu0
    %v2220 = vadd.f32 %v2179, %v2219
    %v2221 = vpop.f32.mrf.mxu0
    %v2222 = vpop.f32.mrf.mxu0
    %2223 = vdwg.mxu0
    %2224 = vmatprep.subr.bf16.mxu0 %v1810
    %2225 = vmatpush1.bf16.msra.mxu0 %v1809
    %2226 = vmatprep.subr.bf16.mxu0 %v1806
    %2227 = vmatpush1.bf16.msra.mxu0 %v1805
    %2228 = vmatprep.subr.bf16.mxu0 %v1802
    %2229 = vmatpush1.bf16.msra.mxu0 %v1801
    %2230 = vmatprep.subr.bf16.mxu0 %v1798
    %2231 = vmatpush1.bf16.msra.mxu0 %v1797
    %2232 = vmatprep.subr.bf16.mxu0 %v1794
    %2233 = vmatpush1.bf16.msra.mxu0 %v1793
    %2234 = vmatprep.subr.bf16.mxu0 %v1790
    %2235 = vmatpush1.bf16.msra.mxu0 %v1789
    %2236 = vmatprep.subr.bf16.mxu0 %v1786
    %2237 = vmatpush1.bf16.msra.mxu0 %v1785
    %2238 = vmatprep.subr.bf16.mxu0 %v1782
    %2239 = vmatpush1.bf16.msra.mxu0 %v1781
    %2240 = vmatprep.subr.bf16.mxu0 %v1842
    %2241 = vmatpush2.bf16.msra.mxu0 %v1841
    %2242 = vmatprep.subr.bf16.mxu0 %v1838
    %2243 = vmatpush2.bf16.msra.mxu0 %v1837
    %2244 = vmatprep.subr.bf16.mxu0 %v1834
    %2245 = vmatpush2.bf16.msra.mxu0 %v1833
    %2246 = vmatprep.subr.bf16.mxu0 %v1830
    %2247 = vmatpush2.bf16.msra.mxu0 %v1829
    %2248 = vmatprep.subr.bf16.mxu0 %v1826
    %2249 = vmatpush2.bf16.msra.mxu0 %v1825
    %2250 = vmatprep.subr.bf16.mxu0 %v1822
    %2251 = vmatpush2.bf16.msra.mxu0 %v1821
    %2252 = vmatprep.subr.bf16.mxu0 %v1818
    %2253 = vmatpush2.bf16.msra.mxu0 %v1817
    %2254 = vmatprep.subr.bf16.mxu0 %v1814
    %2255 = vmatpush2.bf16.msra.mxu0 %v1813
    %2256 = vmatprep.mubr.bf16.mxu0 %v453
    %2257 = vmatmul.mubr.bf16.gmra.mxu0 %v452
    %v2258 = vpop.f32.mrf.mxu0
    %v2259 = vadd.f32 %v2218, %v2258
    %v2260 = vpop.f32.mrf.mxu0
    %v2261 = vadd.f32 %v2220, %v2260
    %v2262 = vpop.f32.mrf.mxu0
    %v2263 = vpop.f32.mrf.mxu0
    %2264 = vdwg.mxu0
    %2265 = vmatprep.subr.bf16.mxu0 %v1620
    %2266 = vmatpush1.bf16.msra.mxu0 %v1619
    %2267 = vmatprep.subr.bf16.mxu0 %v1616
    %2268 = vmatpush1.bf16.msra.mxu0 %v1615
    %2269 = vmatprep.subr.bf16.mxu0 %v1612
    %2270 = vmatpush1.bf16.msra.mxu0 %v1611
    %2271 = vmatprep.subr.bf16.mxu0 %v1608
    %2272 = vmatpush1.bf16.msra.mxu0 %v1607
    %2273 = vmatprep.subr.bf16.mxu0 %v1604
    %2274 = vmatpush1.bf16.msra.mxu0 %v1603
    %2275 = vmatprep.subr.bf16.mxu0 %v1600
    %2276 = vmatpush1.bf16.msra.mxu0 %v1599
    %2277 = vmatprep.subr.bf16.mxu0 %v1596
    %2278 = vmatpush1.bf16.msra.mxu0 %v1595
    %2279 = vmatprep.subr.bf16.mxu0 %v1592
    %2280 = vmatpush1.bf16.msra.mxu0 %v1591
    %2281 = vmatprep.subr.bf16.mxu0 %v1652
    %2282 = vmatpush2.bf16.msra.mxu0 %v1651
    %2283 = vmatprep.subr.bf16.mxu0 %v1648
    %2284 = vmatpush2.bf16.msra.mxu0 %v1647
    %2285 = vmatprep.subr.bf16.mxu0 %v1644
    %2286 = vmatpush2.bf16.msra.mxu0 %v1643
    %2287 = vmatprep.subr.bf16.mxu0 %v1640
    %2288 = vmatpush2.bf16.msra.mxu0 %v1639
    %2289 = vmatprep.subr.bf16.mxu0 %v1636
    %2290 = vmatpush2.bf16.msra.mxu0 %v1635
    %2291 = vmatprep.subr.bf16.mxu0 %v1632
    %2292 = vmatpush2.bf16.msra.mxu0 %v1631
    %2293 = vmatprep.subr.bf16.mxu0 %v1628
    %2294 = vmatpush2.bf16.msra.mxu0 %v1627
    %2295 = vmatprep.subr.bf16.mxu0 %v1624
    %2296 = vmatpush2.bf16.msra.mxu0 %v1623
    %2297 = vmatprep.mubr.bf16.mxu0 %v447
    %2298 = vmatmul.mubr.bf16.gmra.mxu0 %v446
    %v2299 = vpop.f32.mrf.mxu0
    %v2300 = vadd.f32 %v815, %v2299
    %v2301 = vpop.f32.mrf.mxu0
    %v2302 = vadd.f32 %v817, %v2301
    %v2303 = vpop.f32.mrf.mxu0
    %v2304 = vpop.f32.mrf.mxu0
    %2305 = vdwg.mxu0
    %2306 = vmatprep.subr.bf16.mxu0 %v1684
    %2307 = vmatpush1.bf16.msra.mxu0 %v1683
    %2308 = vmatprep.subr.bf16.mxu0 %v1680
    %2309 = vmatpush1.bf16.msra.mxu0 %v1679
    %2310 = vmatprep.subr.bf16.mxu0 %v1676
    %2311 = vmatpush1.bf16.msra.mxu0 %v1675
    %2312 = vmatprep.subr.bf16.mxu0 %v1672
    %2313 = vmatpush1.bf16.msra.mxu0 %v1671
    %2314 = vmatprep.subr.bf16.mxu0 %v1668
    %2315 = vmatpush1.bf16.msra.mxu0 %v1667
    %2316 = vmatprep.subr.bf16.mxu0 %v1664
    %2317 = vmatpush1.bf16.msra.mxu0 %v1663
    %2318 = vmatprep.subr.bf16.mxu0 %v1660
    %2319 = vmatpush1.bf16.msra.mxu0 %v1659
    %2320 = vmatprep.subr.bf16.mxu0 %v1656
    %2321 = vmatpush1.bf16.msra.mxu0 %v1655
    %2322 = vmatprep.subr.bf16.mxu0 %v1716
    %2323 = vmatpush2.bf16.msra.mxu0 %v1715
    %2324 = vmatprep.subr.bf16.mxu0 %v1712
    %2325 = vmatpush2.bf16.msra.mxu0 %v1711
    %2326 = vmatprep.subr.bf16.mxu0 %v1708
    %2327 = vmatpush2.bf16.msra.mxu0 %v1707
    %2328 = vmatprep.subr.bf16.mxu0 %v1704
    %2329 = vmatpush2.bf16.msra.mxu0 %v1703
    %2330 = vmatprep.subr.bf16.mxu0 %v1700
    %2331 = vmatpush2.bf16.msra.mxu0 %v1699
    %2332 = vmatprep.subr.bf16.mxu0 %v1696
    %2333 = vmatpush2.bf16.msra.mxu0 %v1695
    %2334 = vmatprep.subr.bf16.mxu0 %v1692
    %2335 = vmatpush2.bf16.msra.mxu0 %v1691
    %2336 = vmatprep.subr.bf16.mxu0 %v1688
    %2337 = vmatpush2.bf16.msra.mxu0 %v1687
    %2338 = vmatprep.mubr.bf16.mxu0 %v449
    %2339 = vmatmul.mubr.bf16.gmra.mxu0 %v448
    %v2340 = vpop.f32.mrf.mxu0
    %v2341 = vadd.f32 %v2300, %v2340
    %v2342 = vpop.f32.mrf.mxu0
    %v2343 = vadd.f32 %v2302, %v2342
    %v2344 = vpop.f32.mrf.mxu0
    %v2345 = vpop.f32.mrf.mxu0
    %2346 = vdwg.mxu0
    %2347 = vmatprep.subr.bf16.mxu0 %v1748
    %2348 = vmatpush1.bf16.msra.mxu0 %v1747
    %2349 = vmatprep.subr.bf16.mxu0 %v1744
    %2350 = vmatpush1.bf16.msra.mxu0 %v1743
    %2351 = vmatprep.subr.bf16.mxu0 %v1740
    %2352 = vmatpush1.bf16.msra.mxu0 %v1739
    %2353 = vmatprep.subr.bf16.mxu0 %v1736
    %2354 = vmatpush1.bf16.msra.mxu0 %v1735
    %2355 = vmatprep.subr.bf16.mxu0 %v1732
    %2356 = vmatpush1.bf16.msra.mxu0 %v1731
    %2357 = vmatprep.subr.bf16.mxu0 %v1728
    %2358 = vmatpush1.bf16.msra.mxu0 %v1727
    %2359 = vmatprep.subr.bf16.mxu0 %v1724
    %2360 = vmatpush1.bf16.msra.mxu0 %v1723
    %2361 = vmatprep.subr.bf16.mxu0 %v1720
    %2362 = vmatpush1.bf16.msra.mxu0 %v1719
    %2363 = vmatprep.subr.bf16.mxu0 %v1780
    %2364 = vmatpush2.bf16.msra.mxu0 %v1779
    %2365 = vmatprep.subr.bf16.mxu0 %v1776
    %2366 = vmatpush2.bf16.msra.mxu0 %v1775
    %2367 = vmatprep.subr.bf16.mxu0 %v1772
    %2368 = vmatpush2.bf16.msra.mxu0 %v1771
    %2369 = vmatprep.subr.bf16.mxu0 %v1768
    %2370 = vmatpush2.bf16.msra.mxu0 %v1767
    %2371 = vmatprep.subr.bf16.mxu0 %v1764
    %2372 = vmatpush2.bf16.msra.mxu0 %v1763
    %2373 = vmatprep.subr.bf16.mxu0 %v1760
    %2374 = vmatpush2.bf16.msra.mxu0 %v1759
    %2375 = vmatprep.subr.bf16.mxu0 %v1756
    %2376 = vmatpush2.bf16.msra.mxu0 %v1755
    %2377 = vmatprep.subr.bf16.mxu0 %v1752
    %2378 = vmatpush2.bf16.msra.mxu0 %v1751
    %2379 = vmatprep.mubr.bf16.mxu0 %v451
    %2380 = vmatmul.mubr.bf16.gmra.mxu0 %v450
    %v2381 = vpop.f32.mrf.mxu0
    %v2382 = vadd.f32 %v2341, %v2381
    %v2383 = vpop.f32.mrf.mxu0
    %v2384 = vadd.f32 %v2343, %v2383
    %v2385 = vpop.f32.mrf.mxu0
    %v2386 = vpop.f32.mrf.mxu0
    %2387 = vdwg.mxu0
    %2388 = vmatprep.subr.bf16.mxu0 %v1812
    %2389 = vmatpush1.bf16.msra.mxu0 %v1811
    %2390 = vmatprep.subr.bf16.mxu0 %v1808
    %2391 = vmatpush1.bf16.msra.mxu0 %v1807
    %2392 = vmatprep.subr.bf16.mxu0 %v1804
    %2393 = vmatpush1.bf16.msra.mxu0 %v1803
    %2394 = vmatprep.subr.bf16.mxu0 %v1800
    %2395 = vmatpush1.bf16.msra.mxu0 %v1799
    %2396 = vmatprep.subr.bf16.mxu0 %v1796
    %2397 = vmatpush1.bf16.msra.mxu0 %v1795
    %2398 = vmatprep.subr.bf16.mxu0 %v1792
    %2399 = vmatpush1.bf16.msra.mxu0 %v1791
    %2400 = vmatprep.subr.bf16.mxu0 %v1788
    %2401 = vmatpush1.bf16.msra.mxu0 %v1787
    %2402 = vmatprep.subr.bf16.mxu0 %v1784
    %2403 = vmatpush1.bf16.msra.mxu0 %v1783
    %2404 = vmatprep.subr.bf16.mxu0 %v1844
    %2405 = vmatpush2.bf16.msra.mxu0 %v1843
    %2406 = vmatprep.subr.bf16.mxu0 %v1840
    %2407 = vmatpush2.bf16.msra.mxu0 %v1839
    %2408 = vmatprep.subr.bf16.mxu0 %v1836
    %2409 = vmatpush2.bf16.msra.mxu0 %v1835
    %2410 = vmatprep.subr.bf16.mxu0 %v1832
    %2411 = vmatpush2.bf16.msra.mxu0 %v1831
    %2412 = vmatprep.subr.bf16.mxu0 %v1828
    %2413 = vmatpush2.bf16.msra.mxu0 %v1827
    %2414 = vmatprep.subr.bf16.mxu0 %v1824
    %2415 = vmatpush2.bf16.msra.mxu0 %v1823
    %2416 = vmatprep.subr.bf16.mxu0 %v1820
    %2417 = vmatpush2.bf16.msra.mxu0 %v1819
    %2418 = vmatprep.subr.bf16.mxu0 %v1816
    %2419 = vmatpush2.bf16.msra.mxu0 %v1815
    %2420 = vmatprep.mubr.bf16.mxu0 %v453
    %2421 = vmatmul.mubr.bf16.gmra.mxu0 %v452
    %v2422 = vpop.f32.mrf.mxu0
    %v2423 = vadd.f32 %v2382, %v2422
    %v2424 = vpop.f32.mrf.mxu0
    %v2425 = vadd.f32 %v2384, %v2424
    %v2426 = vpop.f32.mrf.mxu0
    %v2427 = vpop.f32.mrf.mxu0
    %2428 = vdwg.mxu0
    %v2429 = vld [vmem:[%s6] sm:$0xf]
    %v2431 = vlaneseq
    %v2432 = vshrl.u32 %v2431, 7
    %v2433 = vsub.s32 0, %v2432
    %v2434 = vrot.slane %v2429, %v2433
    %v2435 = vlaneseq
    %v2436 = vshrl.u32 %v2435, 7
    %v2437 = vsub.s32 1, %v2436
    %v2438 = vrot.slane %v2429, %v2437
    %v2439 = vlaneseq
    %v2440 = vshrl.u32 %v2439, 7
    %v2441 = vsub.s32 2, %v2440
    %v2442 = vrot.slane %v2429, %v2441
    %v2443 = vlaneseq
    %v2444 = vshrl.u32 %v2443, 7
    %v2445 = vsub.s32 3, %v2444
    %v2446 = vrot.slane %v2429, %v2445
    %v2451 = vadd.f32 %v2259, %v2434
    %v2452 = vadd.f32 %v2261, %v2438
    %v2453 = vadd.f32 %v2423, %v2442
    %v2454 = vadd.f32 %v2425, %v2446
    %v2455 = vmax.f32 %v2451, 0.0
    %v2456 = vmax.f32 %v2452, 0.0
    %v2457 = vmax.f32 %v2453, 0.0
    %v2458 = vmax.f32 %v2454, 0.0
    %v2459 = vpack.c.bf16 %v2455, %v2455
    %v2460 = vpack.c.bf16 %v2456, %v2456
    %v2461 = vpack.c.bf16 %v2457, %v2457
    %v2462 = vpack.c.bf16 %v2458, %v2458
    %v2463 = vld [vmem:[#allocation13] sm:$0xff]
    %v2464 = vld [vmem:[#allocation13 + $0x8] sm:$0xf]
    %v2465 = vld [vmem:[#allocation13 + $0xc] sm:$0xff]
    %v2466 = vld [vmem:[#allocation13 + $0x14] sm:$0xf]
    %v2467 = vld [vmem:[#allocation13 + $0x18] sm:$0xff]
    %v2468 = vld [vmem:[#allocation13 + $0x20] sm:$0xf]
    %v2469 = vld [vmem:[#allocation13 + $0x24] sm:$0xff]
    %v2470 = vld [vmem:[#allocation13 + $0x2c] sm:$0xf]
    %v2471 = vld [vmem:[#allocation13 + $0x30] sm:$0xff]
    %v2472 = vld [vmem:[#allocation13 + $0x38] sm:$0xf]
    %v2473 = vld [vmem:[#allocation13 + $0x3c] sm:$0xff]
    %v2474 = vld [vmem:[#allocation13 + $0x44] sm:$0xf]
    %v2475 = vld [vmem:[#allocation13 + $0x48] sm:$0xff]
    %v2476 = vld [vmem:[#allocation13 + $0x50] sm:$0xf]
    %v2477 = vld [vmem:[#allocation13 + $0x54] sm:$0xff]
    %v2478 = vld [vmem:[#allocation13 + $0x5c] sm:$0xf]
    %v2479 = vld [vmem:[#allocation13 + $0x60] sm:$0xff]
    %v2480 = vld [vmem:[#allocation13 + $0x68] sm:$0xf]
    %v2481 = vld [vmem:[#allocation13 + $0x6c] sm:$0xff]
    %v2482 = vld [vmem:[#allocation13 + $0x74] sm:$0xf]
    %v2483 = vld [vmem:[#allocation13 + $0x78] sm:$0xff]
    %v2484 = vld [vmem:[#allocation13 + $0x80] sm:$0xf]
    %v2485 = vld [vmem:[#allocation13 + $0x84] sm:$0xff]
    %v2486 = vld [vmem:[#allocation13 + $0x8c] sm:$0xf]
    %v2487 = vld [vmem:[#allocation13 + $0x90] sm:$0xff]
    %v2488 = vld [vmem:[#allocation13 + $0x98] sm:$0xf]
    %v2489 = vld [vmem:[#allocation13 + $0x9c] sm:$0xff]
    %v2490 = vld [vmem:[#allocation13 + $0xa4] sm:$0xf]
    %v2491 = vld [vmem:[#allocation13 + $0xa8] sm:$0xff]
    %v2492 = vld [vmem:[#allocation13 + $0xb0] sm:$0xf]
    %v2493 = vld [vmem:[#allocation13 + $0xb4] sm:$0xff]
    %v2494 = vld [vmem:[#allocation13 + $0xbc] sm:$0xf]
    %v2495 = vld [vmem:[#allocation13 + $0xc0] sm:$0xff]
    %v2496 = vld [vmem:[#allocation13 + $0xc8] sm:$0xf]
    %v2497 = vld [vmem:[#allocation13 + $0xcc] sm:$0xff]
    %v2498 = vld [vmem:[#allocation13 + $0xd4] sm:$0xf]
    %v2499 = vld [vmem:[#allocation13 + $0xd8] sm:$0xff]
    %v2500 = vld [vmem:[#allocation13 + $0xe0] sm:$0xf]
    %v2501 = vld [vmem:[#allocation13 + $0xe4] sm:$0xff]
    %v2502 = vld [vmem:[#allocation13 + $0xec] sm:$0xf]
    %v2503 = vld [vmem:[#allocation13 + $0xf0] sm:$0xff]
    %v2504 = vld [vmem:[#allocation13 + $0xf8] sm:$0xf]
    %v2505 = vld [vmem:[#allocation13 + $0xfc] sm:$0xff]
    %v2506 = vld [vmem:[#allocation13 + $0x104] sm:$0xf]
    %v2507 = vld [vmem:[#allocation13 + $0x108] sm:$0xff]
    %v2508 = vld [vmem:[#allocation13 + $0x110] sm:$0xf]
    %v2509 = vld [vmem:[#allocation13 + $0x114] sm:$0xff]
    %v2510 = vld [vmem:[#allocation13 + $0x11c] sm:$0xf]
    %v2511 = vld [vmem:[#allocation13 + $0x120] sm:$0xff]
    %v2512 = vld [vmem:[#allocation13 + $0x128] sm:$0xf]
    %v2513 = vld [vmem:[#allocation13 + $0x12c] sm:$0xff]
    %v2514 = vld [vmem:[#allocation13 + $0x134] sm:$0xf]
    %v2515 = vld [vmem:[#allocation13 + $0x138] sm:$0xff]
    %v2516 = vld [vmem:[#allocation13 + $0x140] sm:$0xf]
    %v2517 = vld [vmem:[#allocation13 + $0x144] sm:$0xff]
    %v2518 = vld [vmem:[#allocation13 + $0x14c] sm:$0xf]
    %v2519 = vld [vmem:[#allocation13 + $0x150] sm:$0xff]
    %v2520 = vld [vmem:[#allocation13 + $0x158] sm:$0xf]
    %v2521 = vld [vmem:[#allocation13 + $0x15c] sm:$0xff]
    %v2522 = vld [vmem:[#allocation13 + $0x164] sm:$0xf]
    %v2523 = vld [vmem:[#allocation13 + $0x168] sm:$0xff]
    %v2524 = vld [vmem:[#allocation13 + $0x170] sm:$0xf]
    %v2525 = vld [vmem:[#allocation13 + $0x174] sm:$0xff]
    %v2526 = vld [vmem:[#allocation13 + $0x17c] sm:$0xf]
    %v2527 = vld [vmem:[#allocation13 + $0x180] sm:$0xff]
    %v2528 = vld [vmem:[#allocation13 + $0x188] sm:$0xf]
    %v2529 = vld [vmem:[#allocation13 + $0x18c] sm:$0xff]
    %v2530 = vld [vmem:[#allocation13 + $0x194] sm:$0xf]
    %v2531 = vld [vmem:[#allocation13 + $0x198] sm:$0xff]
    %v2532 = vld [vmem:[#allocation13 + $0x1a0] sm:$0xf]
    %v2533 = vld [vmem:[#allocation13 + $0x1a4] sm:$0xff]
    %v2534 = vld [vmem:[#allocation13 + $0x1ac] sm:$0xf]
    %v2535 = vld [vmem:[#allocation13 + $0x1b0] sm:$0xff]
    %v2536 = vld [vmem:[#allocation13 + $0x1b8] sm:$0xf]
    %v2537 = vld [vmem:[#allocation13 + $0x1bc] sm:$0xff]
    %v2538 = vld [vmem:[#allocation13 + $0x1c4] sm:$0xf]
    %v2539 = vld [vmem:[#allocation13 + $0x1c8] sm:$0xff]
    %v2540 = vld [vmem:[#allocation13 + $0x1d0] sm:$0xf]
    %v2541 = vld [vmem:[#allocation13 + $0x1d4] sm:$0xff]
    %v2542 = vld [vmem:[#allocation13 + $0x1dc] sm:$0xf]
    %v2543 = vld [vmem:[#allocation13 + $0x1e0] sm:$0xff]
    %v2544 = vld [vmem:[#allocation13 + $0x1e8] sm:$0xf]
    %v2545 = vld [vmem:[#allocation13 + $0x1ec] sm:$0xff]
    %v2546 = vld [vmem:[#allocation13 + $0x1f4] sm:$0xf]
    %v2547 = vld [vmem:[#allocation13 + $0x1f8] sm:$0xff]
    %v2548 = vld [vmem:[#allocation13 + $0x200] sm:$0xf]
    %v2549 = vld [vmem:[#allocation13 + $0x204] sm:$0xff]
    %v2550 = vld [vmem:[#allocation13 + $0x20c] sm:$0xf]
    %v2551 = vld [vmem:[#allocation13 + $0x210] sm:$0xff]
    %v2552 = vld [vmem:[#allocation13 + $0x218] sm:$0xf]
    %v2553 = vld [vmem:[#allocation13 + $0x21c] sm:$0xff]
    %v2554 = vld [vmem:[#allocation13 + $0x224] sm:$0xf]
    %v2555 = vld [vmem:[#allocation13 + $0x228] sm:$0xff]
    %v2556 = vld [vmem:[#allocation13 + $0x230] sm:$0xf]
    %v2557 = vld [vmem:[#allocation13 + $0x234] sm:$0xff]
    %v2558 = vld [vmem:[#allocation13 + $0x23c] sm:$0xf]
    %v2559 = vld [vmem:[#allocation13 + $0x240] sm:$0xff]
    %v2560 = vld [vmem:[#allocation13 + $0x248] sm:$0xf]
    %v2561 = vld [vmem:[#allocation13 + $0x24c] sm:$0xff]
    %v2562 = vld [vmem:[#allocation13 + $0x254] sm:$0xf]
    %v2563 = vld [vmem:[#allocation13 + $0x258] sm:$0xff]
    %v2564 = vld [vmem:[#allocation13 + $0x260] sm:$0xf]
    %v2565 = vld [vmem:[#allocation13 + $0x264] sm:$0xff]
    %v2566 = vld [vmem:[#allocation13 + $0x26c] sm:$0xf]
    %v2567 = vld [vmem:[#allocation13 + $0x270] sm:$0xff]
    %v2568 = vld [vmem:[#allocation13 + $0x278] sm:$0xf]
    %v2569 = vld [vmem:[#allocation13 + $0x27c] sm:$0xff]
    %v2570 = vld [vmem:[#allocation13 + $0x284] sm:$0xf]
    %v2571 = vld [vmem:[#allocation13 + $0x288] sm:$0xff]
    %v2572 = vld [vmem:[#allocation13 + $0x290] sm:$0xf]
    %v2573 = vld [vmem:[#allocation13 + $0x294] sm:$0xff]
    %v2574 = vld [vmem:[#allocation13 + $0x29c] sm:$0xf]
    %v2575 = vld [vmem:[#allocation13 + $0x2a0] sm:$0xff]
    %v2576 = vld [vmem:[#allocation13 + $0x2a8] sm:$0xf]
    %v2577 = vld [vmem:[#allocation13 + $0x2ac] sm:$0xff]
    %v2578 = vld [vmem:[#allocation13 + $0x2b4] sm:$0xf]
    %v2579 = vld [vmem:[#allocation13 + $0x2b8] sm:$0xff]
    %v2580 = vld [vmem:[#allocation13 + $0x2c0] sm:$0xf]
    %v2581 = vld [vmem:[#allocation13 + $0x2c4] sm:$0xff]
    %v2582 = vld [vmem:[#allocation13 + $0x2cc] sm:$0xf]
    %v2583 = vld [vmem:[#allocation13 + $0x2d0] sm:$0xff]
    %v2584 = vld [vmem:[#allocation13 + $0x2d8] sm:$0xf]
    %v2585 = vld [vmem:[#allocation13 + $0x2dc] sm:$0xff]
    %v2586 = vld [vmem:[#allocation13 + $0x2e4] sm:$0xf]
    %v2587 = vld [vmem:[#allocation13 + $0x2e8] sm:$0xff]
    %v2588 = vld [vmem:[#allocation13 + $0x2f0] sm:$0xf]
    %v2589 = vld [vmem:[#allocation13 + $0x2f4] sm:$0xff]
    %v2590 = vld [vmem:[#allocation13 + $0x2fc] sm:$0xf]
    %v2591 = vld [vmem:[%s8] sm:$0x7]
    %v2593 = vlaneseq
    %v2594 = vshrl.u32 %v2593, 7
    %v2595 = vsub.s32 0, %v2594
    %v2596 = vrot.slane %v2591, %v2595
    %v2597 = vlaneseq
    %v2598 = vshrl.u32 %v2597, 7
    %v2599 = vsub.s32 1, %v2598
    %v2600 = vrot.slane %v2591, %v2599
    %v2601 = vlaneseq
    %v2602 = vshrl.u32 %v2601, 7
    %v2603 = vsub.s32 2, %v2602
    %v2604 = vrot.slane %v2591, %v2603
    %v2736 = vunpack.c.l.b16 %v2463
    %v2737 = vunpack.c.h.b16 %v2463
    %v2738 = vunpack.c.l.b16 %v2464
    %v2739 = vunpack.c.l.b16 %v2465
    %v2740 = vunpack.c.h.b16 %v2465
    %v2741 = vunpack.c.l.b16 %v2466
    %v2742 = vunpack.c.l.b16 %v2467
    %v2743 = vunpack.c.h.b16 %v2467
    %v2744 = vunpack.c.l.b16 %v2468
    %v2745 = vunpack.c.l.b16 %v2469
    %v2746 = vunpack.c.h.b16 %v2469
    %v2747 = vunpack.c.l.b16 %v2470
    %v2748 = vunpack.c.l.b16 %v2471
    %v2749 = vunpack.c.h.b16 %v2471
    %v2750 = vunpack.c.l.b16 %v2472
    %v2751 = vunpack.c.l.b16 %v2473
    %v2752 = vunpack.c.h.b16 %v2473
    %v2753 = vunpack.c.l.b16 %v2474
    %v2754 = vunpack.c.l.b16 %v2475
    %v2755 = vunpack.c.h.b16 %v2475
    %v2756 = vunpack.c.l.b16 %v2476
    %v2757 = vunpack.c.l.b16 %v2477
    %v2758 = vunpack.c.h.b16 %v2477
    %v2759 = vunpack.c.l.b16 %v2478
    %v2760 = vunpack.c.l.b16 %v2479
    %v2761 = vunpack.c.h.b16 %v2479
    %v2762 = vunpack.c.l.b16 %v2480
    %v2763 = vunpack.c.l.b16 %v2481
    %v2764 = vunpack.c.h.b16 %v2481
    %v2765 = vunpack.c.l.b16 %v2482
    %v2766 = vunpack.c.l.b16 %v2483
    %v2767 = vunpack.c.h.b16 %v2483
    %v2768 = vunpack.c.l.b16 %v2484
    %v2769 = vunpack.c.l.b16 %v2485
    %v2770 = vunpack.c.h.b16 %v2485
    %v2771 = vunpack.c.l.b16 %v2486
    %v2772 = vunpack.c.l.b16 %v2487
    %v2773 = vunpack.c.h.b16 %v2487
    %v2774 = vunpack.c.l.b16 %v2488
    %v2775 = vunpack.c.l.b16 %v2489
    %v2776 = vunpack.c.h.b16 %v2489
    %v2777 = vunpack.c.l.b16 %v2490
    %v2778 = vunpack.c.l.b16 %v2491
    %v2779 = vunpack.c.h.b16 %v2491
    %v2780 = vunpack.c.l.b16 %v2492
    %v2781 = vunpack.c.l.b16 %v2493
    %v2782 = vunpack.c.h.b16 %v2493
    %v2783 = vunpack.c.l.b16 %v2494
    %v2784 = vunpack.c.l.b16 %v2495
    %v2785 = vunpack.c.h.b16 %v2495
    %v2786 = vunpack.c.l.b16 %v2496
    %v2787 = vunpack.c.l.b16 %v2497
    %v2788 = vunpack.c.h.b16 %v2497
    %v2789 = vunpack.c.l.b16 %v2498
    %v2790 = vunpack.c.l.b16 %v2499
    %v2791 = vunpack.c.h.b16 %v2499
    %v2792 = vunpack.c.l.b16 %v2500
    %v2793 = vunpack.c.l.b16 %v2501
    %v2794 = vunpack.c.h.b16 %v2501
    %v2795 = vunpack.c.l.b16 %v2502
    %v2796 = vunpack.c.l.b16 %v2503
    %v2797 = vunpack.c.h.b16 %v2503
    %v2798 = vunpack.c.l.b16 %v2504
    %v2799 = vunpack.c.l.b16 %v2505
    %v2800 = vunpack.c.h.b16 %v2505
    %v2801 = vunpack.c.l.b16 %v2506
    %v2802 = vunpack.c.l.b16 %v2507
    %v2803 = vunpack.c.h.b16 %v2507
    %v2804 = vunpack.c.l.b16 %v2508
    %v2805 = vunpack.c.l.b16 %v2509
    %v2806 = vunpack.c.h.b16 %v2509
    %v2807 = vunpack.c.l.b16 %v2510
    %v2808 = vunpack.c.l.b16 %v2511
    %v2809 = vunpack.c.h.b16 %v2511
    %v2810 = vunpack.c.l.b16 %v2512
    %v2811 = vunpack.c.l.b16 %v2513
    %v2812 = vunpack.c.h.b16 %v2513
    %v2813 = vunpack.c.l.b16 %v2514
    %v2814 = vunpack.c.l.b16 %v2515
    %v2815 = vunpack.c.h.b16 %v2515
    %v2816 = vunpack.c.l.b16 %v2516
    %v2817 = vunpack.c.l.b16 %v2517
    %v2818 = vunpack.c.h.b16 %v2517
    %v2819 = vunpack.c.l.b16 %v2518
    %v2820 = vunpack.c.l.b16 %v2519
    %v2821 = vunpack.c.h.b16 %v2519
    %v2822 = vunpack.c.l.b16 %v2520
    %v2823 = vunpack.c.l.b16 %v2521
    %v2824 = vunpack.c.h.b16 %v2521
    %v2825 = vunpack.c.l.b16 %v2522
    %v2826 = vunpack.c.l.b16 %v2523
    %v2827 = vunpack.c.h.b16 %v2523
    %v2828 = vunpack.c.l.b16 %v2524
    %v2829 = vunpack.c.l.b16 %v2525
    %v2830 = vunpack.c.h.b16 %v2525
    %v2831 = vunpack.c.l.b16 %v2526
    %v2832 = vunpack.c.l.b16 %v2527
    %v2833 = vunpack.c.h.b16 %v2527
    %v2834 = vunpack.c.l.b16 %v2528
    %v2835 = vunpack.c.l.b16 %v2529
    %v2836 = vunpack.c.h.b16 %v2529
    %v2837 = vunpack.c.l.b16 %v2530
    %v2838 = vunpack.c.l.b16 %v2531
    %v2839 = vunpack.c.h.b16 %v2531
    %v2840 = vunpack.c.l.b16 %v2532
    %v2841 = vunpack.c.l.b16 %v2533
    %v2842 = vunpack.c.h.b16 %v2533
    %v2843 = vunpack.c.l.b16 %v2534
    %v2844 = vunpack.c.l.b16 %v2535
    %v2845 = vunpack.c.h.b16 %v2535
    %v2846 = vunpack.c.l.b16 %v2536
    %v2847 = vunpack.c.l.b16 %v2537
    %v2848 = vunpack.c.h.b16 %v2537
    %v2849 = vunpack.c.l.b16 %v2538
    %v2850 = vunpack.c.l.b16 %v2539
    %v2851 = vunpack.c.h.b16 %v2539
    %v2852 = vunpack.c.l.b16 %v2540
    %v2853 = vunpack.c.l.b16 %v2541
    %v2854 = vunpack.c.h.b16 %v2541
    %v2855 = vunpack.c.l.b16 %v2542
    %v2856 = vunpack.c.l.b16 %v2543
    %v2857 = vunpack.c.h.b16 %v2543
    %v2858 = vunpack.c.l.b16 %v2544
    %v2859 = vunpack.c.l.b16 %v2545
    %v2860 = vunpack.c.h.b16 %v2545
    %v2861 = vunpack.c.l.b16 %v2546
    %v2862 = vunpack.c.l.b16 %v2547
    %v2863 = vunpack.c.h.b16 %v2547
    %v2864 = vunpack.c.l.b16 %v2548
    %v2865 = vunpack.c.l.b16 %v2549
    %v2866 = vunpack.c.h.b16 %v2549
    %v2867 = vunpack.c.l.b16 %v2550
    %v2868 = vunpack.c.l.b16 %v2551
    %v2869 = vunpack.c.h.b16 %v2551
    %v2870 = vunpack.c.l.b16 %v2552
    %v2871 = vunpack.c.l.b16 %v2553
    %v2872 = vunpack.c.h.b16 %v2553
    %v2873 = vunpack.c.l.b16 %v2554
    %v2874 = vunpack.c.l.b16 %v2555
    %v2875 = vunpack.c.h.b16 %v2555
    %v2876 = vunpack.c.l.b16 %v2556
    %v2877 = vunpack.c.l.b16 %v2557
    %v2878 = vunpack.c.h.b16 %v2557
    %v2879 = vunpack.c.l.b16 %v2558
    %v2880 = vunpack.c.l.b16 %v2559
    %v2881 = vunpack.c.h.b16 %v2559
    %v2882 = vunpack.c.l.b16 %v2560
    %v2883 = vunpack.c.l.b16 %v2561
    %v2884 = vunpack.c.h.b16 %v2561
    %v2885 = vunpack.c.l.b16 %v2562
    %v2886 = vunpack.c.l.b16 %v2563
    %v2887 = vunpack.c.h.b16 %v2563
    %v2888 = vunpack.c.l.b16 %v2564
    %v2889 = vunpack.c.l.b16 %v2565
    %v2890 = vunpack.c.h.b16 %v2565
    %v2891 = vunpack.c.l.b16 %v2566
    %v2892 = vunpack.c.l.b16 %v2567
    %v2893 = vunpack.c.h.b16 %v2567
    %v2894 = vunpack.c.l.b16 %v2568
    %v2895 = vunpack.c.l.b16 %v2569
    %v2896 = vunpack.c.h.b16 %v2569
    %v2897 = vunpack.c.l.b16 %v2570
    %v2898 = vunpack.c.l.b16 %v2571
    %v2899 = vunpack.c.h.b16 %v2571
    %v2900 = vunpack.c.l.b16 %v2572
    %v2901 = vunpack.c.l.b16 %v2573
    %v2902 = vunpack.c.h.b16 %v2573
    %v2903 = vunpack.c.l.b16 %v2574
    %v2904 = vunpack.c.l.b16 %v2575
    %v2905 = vunpack.c.h.b16 %v2575
    %v2906 = vunpack.c.l.b16 %v2576
    %v2907 = vunpack.c.l.b16 %v2577
    %v2908 = vunpack.c.h.b16 %v2577
    %v2909 = vunpack.c.l.b16 %v2578
    %v2910 = vunpack.c.l.b16 %v2579
    %v2911 = vunpack.c.h.b16 %v2579
    %v2912 = vunpack.c.l.b16 %v2580
    %v2913 = vunpack.c.l.b16 %v2581
    %v2914 = vunpack.c.h.b16 %v2581
    %v2915 = vunpack.c.l.b16 %v2582
    %v2916 = vunpack.c.l.b16 %v2583
    %v2917 = vunpack.c.h.b16 %v2583
    %v2918 = vunpack.c.l.b16 %v2584
    %v2919 = vunpack.c.l.b16 %v2585
    %v2920 = vunpack.c.h.b16 %v2585
    %v2921 = vunpack.c.l.b16 %v2586
    %v2922 = vunpack.c.l.b16 %v2587
    %v2923 = vunpack.c.h.b16 %v2587
    %v2924 = vunpack.c.l.b16 %v2588
    %v2925 = vunpack.c.l.b16 %v2589
    %v2926 = vunpack.c.h.b16 %v2589
    %v2927 = vunpack.c.l.b16 %v2590
    %v2928 = vpack.c.b16 %v2739, %v2736
    %v2929 = vpack.c.b16 %v2740, %v2737
    %v2930 = vpack.c.b16 %v2741, %v2738
    %v2931 = vpack.c.b16 %v2745, %v2742
    %v2932 = vpack.c.b16 %v2746, %v2743
    %v2933 = vpack.c.b16 %v2747, %v2744
    %v2934 = vpack.c.b16 %v2751, %v2748
    %v2935 = vpack.c.b16 %v2752, %v2749
    %v2936 = vpack.c.b16 %v2753, %v2750
    %v2937 = vpack.c.b16 %v2757, %v2754
    %v2938 = vpack.c.b16 %v2758, %v2755
    %v2939 = vpack.c.b16 %v2759, %v2756
    %v2940 = vpack.c.b16 %v2763, %v2760
    %v2941 = vpack.c.b16 %v2764, %v2761
    %v2942 = vpack.c.b16 %v2765, %v2762
    %v2943 = vpack.c.b16 %v2769, %v2766
    %v2944 = vpack.c.b16 %v2770, %v2767
    %v2945 = vpack.c.b16 %v2771, %v2768
    %v2946 = vpack.c.b16 %v2775, %v2772
    %v2947 = vpack.c.b16 %v2776, %v2773
    %v2948 = vpack.c.b16 %v2777, %v2774
    %v2949 = vpack.c.b16 %v2781, %v2778
    %v2950 = vpack.c.b16 %v2782, %v2779
    %v2951 = vpack.c.b16 %v2783, %v2780
    %v2952 = vpack.c.b16 %v2787, %v2784
    %v2953 = vpack.c.b16 %v2788, %v2785
    %v2954 = vpack.c.b16 %v2789, %v2786
    %v2955 = vpack.c.b16 %v2793, %v2790
    %v2956 = vpack.c.b16 %v2794, %v2791
    %v2957 = vpack.c.b16 %v2795, %v2792
    %v2958 = vpack.c.b16 %v2799, %v2796
    %v2959 = vpack.c.b16 %v2800, %v2797
    %v2960 = vpack.c.b16 %v2801, %v2798
    %v2961 = vpack.c.b16 %v2805, %v2802
    %v2962 = vpack.c.b16 %v2806, %v2803
    %v2963 = vpack.c.b16 %v2807, %v2804
    %v2964 = vpack.c.b16 %v2811, %v2808
    %v2965 = vpack.c.b16 %v2812, %v2809
    %v2966 = vpack.c.b16 %v2813, %v2810
    %v2967 = vpack.c.b16 %v2817, %v2814
    %v2968 = vpack.c.b16 %v2818, %v2815
    %v2969 = vpack.c.b16 %v2819, %v2816
    %v2970 = vpack.c.b16 %v2823, %v2820
    %v2971 = vpack.c.b16 %v2824, %v2821
    %v2972 = vpack.c.b16 %v2825, %v2822
    %v2973 = vpack.c.b16 %v2829, %v2826
    %v2974 = vpack.c.b16 %v2830, %v2827
    %v2975 = vpack.c.b16 %v2831, %v2828
    %v2976 = vpack.c.b16 %v2835, %v2832
    %v2977 = vpack.c.b16 %v2836, %v2833
    %v2978 = vpack.c.b16 %v2837, %v2834
    %v2979 = vpack.c.b16 %v2841, %v2838
    %v2980 = vpack.c.b16 %v2842, %v2839
    %v2981 = vpack.c.b16 %v2843, %v2840
    %v2982 = vpack.c.b16 %v2847, %v2844
    %v2983 = vpack.c.b16 %v2848, %v2845
    %v2984 = vpack.c.b16 %v2849, %v2846
    %v2985 = vpack.c.b16 %v2853, %v2850
    %v2986 = vpack.c.b16 %v2854, %v2851
    %v2987 = vpack.c.b16 %v2855, %v2852
    %v2988 = vpack.c.b16 %v2859, %v2856
    %v2989 = vpack.c.b16 %v2860, %v2857
    %v2990 = vpack.c.b16 %v2861, %v2858
    %v2991 = vpack.c.b16 %v2865, %v2862
    %v2992 = vpack.c.b16 %v2866, %v2863
    %v2993 = vpack.c.b16 %v2867, %v2864
    %v2994 = vpack.c.b16 %v2871, %v2868
    %v2995 = vpack.c.b16 %v2872, %v2869
    %v2996 = vpack.c.b16 %v2873, %v2870
    %v2997 = vpack.c.b16 %v2877, %v2874
    %v2998 = vpack.c.b16 %v2878, %v2875
    %v2999 = vpack.c.b16 %v2879, %v2876
    %v3000 = vpack.c.b16 %v2883, %v2880
    %v3001 = vpack.c.b16 %v2884, %v2881
    %v3002 = vpack.c.b16 %v2885, %v2882
    %v3003 = vpack.c.b16 %v2889, %v2886
    %v3004 = vpack.c.b16 %v2890, %v2887
    %v3005 = vpack.c.b16 %v2891, %v2888
    %v3006 = vpack.c.b16 %v2895, %v2892
    %v3007 = vpack.c.b16 %v2896, %v2893
    %v3008 = vpack.c.b16 %v2897, %v2894
    %v3009 = vpack.c.b16 %v2901, %v2898
    %v3010 = vpack.c.b16 %v2902, %v2899
    %v3011 = vpack.c.b16 %v2903, %v2900
    %v3012 = vpack.c.b16 %v2907, %v2904
    %v3013 = vpack.c.b16 %v2908, %v2905
    %v3014 = vpack.c.b16 %v2909, %v2906
    %v3015 = vpack.c.b16 %v2913, %v2910
    %v3016 = vpack.c.b16 %v2914, %v2911
    %v3017 = vpack.c.b16 %v2915, %v2912
    %v3018 = vpack.c.b16 %v2919, %v2916
    %v3019 = vpack.c.b16 %v2920, %v2917
    %v3020 = vpack.c.b16 %v2921, %v2918
    %v3021 = vpack.c.b16 %v2925, %v2922
    %v3022 = vpack.c.b16 %v2926, %v2923
    %v3023 = vpack.c.b16 %v2927, %v2924
    %3120 = vmatprep.subr.bf16.mxu0 %v2950
    %3121 = vmatpush1.bf16.msra.mxu0 %v2949
    %3122 = vmatprep.subr.bf16.mxu0 %v2947
    %3123 = vmatpush1.bf16.msra.mxu0 %v2946
    %3124 = vmatprep.subr.bf16.mxu0 %v2944
    %3125 = vmatpush1.bf16.msra.mxu0 %v2943
    %3126 = vmatprep.subr.bf16.mxu0 %v2941
    %3127 = vmatpush1.bf16.msra.mxu0 %v2940
    %3128 = vmatprep.subr.bf16.mxu0 %v2938
    %3129 = vmatpush1.bf16.msra.mxu0 %v2937
    %3130 = vmatprep.subr.bf16.mxu0 %v2935
    %3131 = vmatpush1.bf16.msra.mxu0 %v2934
    %3132 = vmatprep.subr.bf16.mxu0 %v2932
    %3133 = vmatpush1.bf16.msra.mxu0 %v2931
    %3134 = vmatprep.subr.bf16.mxu0 %v2929
    %3135 = vmatpush1.bf16.msra.mxu0 %v2928
    %3136 = vmatprep.subr.bf16.mxu0 %v2974
    %3137 = vmatpush2.bf16.msra.mxu0 %v2973
    %3138 = vmatprep.subr.bf16.mxu0 %v2971
    %3139 = vmatpush2.bf16.msra.mxu0 %v2970
    %3140 = vmatprep.subr.bf16.mxu0 %v2968
    %3141 = vmatpush2.bf16.msra.mxu0 %v2967
    %3142 = vmatprep.subr.bf16.mxu0 %v2965
    %3143 = vmatpush2.bf16.msra.mxu0 %v2964
    %3144 = vmatprep.subr.bf16.mxu0 %v2962
    %3145 = vmatpush2.bf16.msra.mxu0 %v2961
    %3146 = vmatprep.subr.bf16.mxu0 %v2959
    %3147 = vmatpush2.bf16.msra.mxu0 %v2958
    %3148 = vmatprep.subr.bf16.mxu0 %v2956
    %3149 = vmatpush2.bf16.msra.mxu0 %v2955
    %3150 = vmatprep.subr.bf16.mxu0 %v2953
    %3151 = vmatpush2.bf16.msra.mxu0 %v2952
    %3152 = vmatprep.mubr.bf16.mxu0 %v2460
    %3153 = vmatmul.mubr.bf16.gmra.mxu0 %v2459
    %v3154 = vpop.f32.mrf.mxu0
    %v3155 = vadd.f32 %v2596, %v3154
    %v3156 = vpop.f32.mrf.mxu0
    %v3157 = vadd.f32 %v2600, %v3156
    %v3158 = vpop.f32.mrf.mxu0
    %v3159 = vpop.f32.mrf.mxu0
    %3160 = vdwg.mxu0
    %3161 = vmatprep.subr.bf16.mxu0 %v2998
    %3162 = vmatpush1.bf16.msra.mxu0 %v2997
    %3163 = vmatprep.subr.bf16.mxu0 %v2995
    %3164 = vmatpush1.bf16.msra.mxu0 %v2994
    %3165 = vmatprep.subr.bf16.mxu0 %v2992
    %3166 = vmatpush1.bf16.msra.mxu0 %v2991
    %3167 = vmatprep.subr.bf16.mxu0 %v2989
    %3168 = vmatpush1.bf16.msra.mxu0 %v2988
    %3169 = vmatprep.subr.bf16.mxu0 %v2986
    %3170 = vmatpush1.bf16.msra.mxu0 %v2985
    %3171 = vmatprep.subr.bf16.mxu0 %v2983
    %3172 = vmatpush1.bf16.msra.mxu0 %v2982
    %3173 = vmatprep.subr.bf16.mxu0 %v2980
    %3174 = vmatpush1.bf16.msra.mxu0 %v2979
    %3175 = vmatprep.subr.bf16.mxu0 %v2977
    %3176 = vmatpush1.bf16.msra.mxu0 %v2976
    %3177 = vmatprep.subr.bf16.mxu0 %v3022
    %3178 = vmatpush2.bf16.msra.mxu0 %v3021
    %3179 = vmatprep.subr.bf16.mxu0 %v3019
    %3180 = vmatpush2.bf16.msra.mxu0 %v3018
    %3181 = vmatprep.subr.bf16.mxu0 %v3016
    %3182 = vmatpush2.bf16.msra.mxu0 %v3015
    %3183 = vmatprep.subr.bf16.mxu0 %v3013
    %3184 = vmatpush2.bf16.msra.mxu0 %v3012
    %3185 = vmatprep.subr.bf16.mxu0 %v3010
    %3186 = vmatpush2.bf16.msra.mxu0 %v3009
    %3187 = vmatprep.subr.bf16.mxu0 %v3007
    %3188 = vmatpush2.bf16.msra.mxu0 %v3006
    %3189 = vmatprep.subr.bf16.mxu0 %v3004
    %3190 = vmatpush2.bf16.msra.mxu0 %v3003
    %3191 = vmatprep.subr.bf16.mxu0 %v3001
    %3192 = vmatpush2.bf16.msra.mxu0 %v3000
    %3193 = vmatprep.mubr.bf16.mxu0 %v2462
    %3194 = vmatmul.mubr.bf16.gmra.mxu0 %v2461
    %v3195 = vpop.f32.mrf.mxu0
    %v3196 = vadd.f32 %v3155, %v3195
    %v3197 = vpop.f32.mrf.mxu0
    %v3198 = vadd.f32 %v3157, %v3197
    %v3199 = vpop.f32.mrf.mxu0
    %v3200 = vpop.f32.mrf.mxu0
    %3201 = vdwg.mxu0
    %3202 = vmatprep.subr.bf16.mxu0 0
    %3203 = vmatpush1.bf16.msra.mxu0 %v2951
    %3204 = vmatprep.subr.bf16.mxu0 0
    %3205 = vmatpush1.bf16.msra.mxu0 %v2948
    %3206 = vmatprep.subr.bf16.mxu0 0
    %3207 = vmatpush1.bf16.msra.mxu0 %v2945
    %3208 = vmatprep.subr.bf16.mxu0 0
    %3209 = vmatpush1.bf16.msra.mxu0 %v2942
    %3210 = vmatprep.subr.bf16.mxu0 0
    %3211 = vmatpush1.bf16.msra.mxu0 %v2939
    %3212 = vmatprep.subr.bf16.mxu0 0
    %3213 = vmatpush1.bf16.msra.mxu0 %v2936
    %3214 = vmatprep.subr.bf16.mxu0 0
    %3215 = vmatpush1.bf16.msra.mxu0 %v2933
    %3216 = vmatprep.subr.bf16.mxu0 0
    %3217 = vmatpush1.bf16.msra.mxu0 %v2930
    %3218 = vmatprep.subr.bf16.mxu0 0
    %3219 = vmatpush2.bf16.msra.mxu0 %v2975
    %3220 = vmatprep.subr.bf16.mxu0 0
    %3221 = vmatpush2.bf16.msra.mxu0 %v2972
    %3222 = vmatprep.subr.bf16.mxu0 0
    %3223 = vmatpush2.bf16.msra.mxu0 %v2969
    %3224 = vmatprep.subr.bf16.mxu0 0
    %3225 = vmatpush2.bf16.msra.mxu0 %v2966
    %3226 = vmatprep.subr.bf16.mxu0 0
    %3227 = vmatpush2.bf16.msra.mxu0 %v2963
    %3228 = vmatprep.subr.bf16.mxu0 0
    %3229 = vmatpush2.bf16.msra.mxu0 %v2960
    %3230 = vmatprep.subr.bf16.mxu0 0
    %3231 = vmatpush2.bf16.msra.mxu0 %v2957
    %3232 = vmatprep.subr.bf16.mxu0 0
    %3233 = vmatpush2.bf16.msra.mxu0 %v2954
    %3234 = vmatprep.mubr.bf16.mxu0 %v2460
    %3235 = vmatmul.mubr.bf16.gmra.mxu0 %v2459
    %v3236 = vpop.f32.mrf.mxu0
    %v3237 = vadd.f32 %v2604, %v3236
    %v3238 = vpop.f32.mrf.mxu0
    %v3239 = vpop.f32.mrf.mxu0
    %v3240 = vpop.f32.mrf.mxu0
    %3241 = vdwg.mxu0
    %3242 = vmatprep.subr.bf16.mxu0 0
    %3243 = vmatpush1.bf16.msra.mxu0 %v2999
    %3244 = vmatprep.subr.bf16.mxu0 0
    %3245 = vmatpush1.bf16.msra.mxu0 %v2996
    %3246 = vmatprep.subr.bf16.mxu0 0
    %3247 = vmatpush1.bf16.msra.mxu0 %v2993
    %3248 = vmatprep.subr.bf16.mxu0 0
    %3249 = vmatpush1.bf16.msra.mxu0 %v2990
    %3250 = vmatprep.subr.bf16.mxu0 0
    %3251 = vmatpush1.bf16.msra.mxu0 %v2987
    %3252 = vmatprep.subr.bf16.mxu0 0
    %3253 = vmatpush1.bf16.msra.mxu0 %v2984
    %3254 = vmatprep.subr.bf16.mxu0 0
    %3255 = vmatpush1.bf16.msra.mxu0 %v2981
    %3256 = vmatprep.subr.bf16.mxu0 0
    %3257 = vmatpush1.bf16.msra.mxu0 %v2978
    %3258 = vmatprep.subr.bf16.mxu0 0
    %3259 = vmatpush2.bf16.msra.mxu0 %v3023
    %3260 = vmatprep.subr.bf16.mxu0 0
    %3261 = vmatpush2.bf16.msra.mxu0 %v3020
    %3262 = vmatprep.subr.bf16.mxu0 0
    %3263 = vmatpush2.bf16.msra.mxu0 %v3017
    %3264 = vmatprep.subr.bf16.mxu0 0
    %3265 = vmatpush2.bf16.msra.mxu0 %v3014
    %3266 = vmatprep.subr.bf16.mxu0 0
    %3267 = vmatpush2.bf16.msra.mxu0 %v3011
    %3268 = vmatprep.subr.bf16.mxu0 0
    %3269 = vmatpush2.bf16.msra.mxu0 %v3008
    %3270 = vmatprep.subr.bf16.mxu0 0
    %3271 = vmatpush2.bf16.msra.mxu0 %v3005
    %3272 = vmatprep.subr.bf16.mxu0 0
    %3273 = vmatpush2.bf16.msra.mxu0 %v3002
    %3274 = vmatprep.mubr.bf16.mxu0 %v2462
    %3275 = vmatmul.mubr.bf16.gmra.mxu0 %v2461
    %v3276 = vpop.f32.mrf.mxu0
    %v3277 = vadd.f32 %v3237, %v3276
    %v3278 = vpop.f32.mrf.mxu0
    %v3279 = vpop.f32.mrf.mxu0
    %v3280 = vpop.f32.mrf.mxu0
    %3281 = vdwg.mxu0
    %v3282 = vmax.f32 %v3196, 0.0
    %v3283 = vmax.f32 %v3198, 0.0
    %v3284 = vmax.f32 %v3277, 0.0
    %v3285 = vld [vmem:[%s9] sm:$0x7]
    %v3287 = vlaneseq
    %v3288 = vshrl.u32 %v3287, 7
    %v3289 = vsub.s32 0, %v3288
    %v3290 = vrot.slane %v3285, %v3289
    %v3291 = vlaneseq
    %v3292 = vshrl.u32 %v3291, 7
    %v3293 = vsub.s32 1, %v3292
    %v3294 = vrot.slane %v3285, %v3293
    %v3295 = vlaneseq
    %v3296 = vshrl.u32 %v3295, 7
    %v3297 = vsub.s32 2, %v3296
    %v3298 = vrot.slane %v3285, %v3297
    %v3302 = vmul.f32 %v3282, %v3290
    %v3303 = vmul.f32 %v3283, %v3294
    %v3304 = vmul.f32 %v3284, %v3298
    %vm3305 = vcmask 1041408
    %v3306 = vsel %vm3305, %v3302, 0.0
    %v3307 = vsel %vm3305, %v3303, 0.0
    %v3308 = vadd.f32 %v3306, %v3307
    %v3309 = vsel %vm3305, %v3304, 0.0
    %v3310 = vadd.f32 %v3308, %v3309
    %3311 = vadd.xlane.f32.xlu0 %v3310
    %v3312 = vpop.xlane.xlu0 %3311
    %v3313 = vld [vmem:[#allocation2] sm:$0x1]
    %v3315 = vlaneseq
    %v3316 = vshrl.u32 %v3315, 7
    %v3317 = vsub.s32 0, %v3316
    %v3318 = vrot.slane %v3313, %v3317
    %v3320 = vadd.f32 %v3312, %v3318
    %vm3321 = vcmask 1024
    %3322 = vst.msk [vmem:[%s11] sm:$0x3] %vm3321, %v3320
    // Predicated region
    $region74: #{critic_forward.1} parent=1 // pred_check
      _
    $region75: #{critic_forward.1} parent=1 // pred_check_branch
      %3324 = sbr.rel (0) target = $region77
    $region76: #{critic_forward.1} parent=1 // pred_region
      _
    $region77: #{critic_forward.1} parent=1 // pred_fallthru
      _
    // Predicated region
    $region78: #{critic_forward.1} parent=1 // pred_check
      _
    $region79: #{critic_forward.1} parent=1 // pred_check_branch
      %3326 = sbr.rel (0) target = $region81
    $region80: #{critic_forward.1} parent=1 // pred_region
      _
    $region81: #{critic_forward.1} parent=1 // pred_fallthru
      _
    %3327 = vsyncpa [#allocation4], 1
    %3328 = vsyncpa [#allocation6], 1
    %3329 = vsyncpa [#allocation9], 1
    %3330 = vsyncpa [#allocation12], 1

</llo_original>
